<compile_context>
chip_gen: v7x
topology: tpu7x:2x2x1
jax: 0.10.0
libtpu: 0.0.40
codegen_flags: <defaults>
</compile_context>

<pallas_src>
import functools

import jax
import jax.numpy as jnp
from jax import lax
from jax.experimental import pallas as pl
from jax.experimental.pallas import tpu as pltpu

EPS = 1e-5
LANE = 128          # output channels are padded to a multiple of this (lane-dense stores)
MAX_TILE_P = 512    # rows (N*H*W positions) per grid step


def _round_up(x, m):
    return (x + m - 1) // m * m


# ----------------------------------------------------------------------------
# Pallas kernels
# ----------------------------------------------------------------------------
def _conv_stats_kernel(cols_ref, w_ref, y_ref, stats_ref):
    """3x3 conv tile as ONE fused K=9*Cin matmul + per-channel partial stats.

    cols_ref : (TP, 9*Cin)  bf16   im2col rows for this tile (zero rows = P padding)
    w_ref    : (9*Cin, Cp)  bf16   reshaped conv weight, Cout zero-padded to Cp
    y_ref    : (TP, Cp)     f32    conv output (pre-BN) for this tile
    stats_ref: (2, Cp)      f32    [sum, sum-of-squares] over this tile's rows
    """
    acc = jnp.dot(cols_ref[...], w_ref[...], preferred_element_type=jnp.float32)
    # Conv bias intentionally dropped: training-mode BatchNorm subtracts the
    # per-channel mean right after, so a constant per-channel bias cancels exactly.
    y_ref[...] = acc
    # Zero-padded rows contribute exactly 0 to both partials -> no mask needed here.
    stats_ref[...] = jnp.concatenate(
        [jnp.sum(acc, axis=0, keepdims=True),
         jnp.sum(acc * acc, axis=0, keepdims=True)], axis=0)


def _bn_relu_kernel(y_ref, scale_ref, shift_ref, a_ref):
    """a = relu(y*scale + shift), stored bf16 (feeds the next conv's MXU operands)."""
    a_ref[...] = jnp.maximum(
        y_ref[...] * scale_ref[...] + shift_ref[...], 0.0).astype(a_ref.dtype)


def _bn_relu_stats_kernel(y_ref, scale_ref, shift_ref, stats_ref, *, valid_rows):
    """Per-tile [sum, sumsq] of relu(y*scale + shift) WITHOUT writing the activation.

    These partials feed the trailing BatchNorm of `Down`; rows beyond the true P
    (tile padding) are masked so they do not pollute batch stats.
    """
    z = jnp.maximum(y_ref[...] * scale_ref[...] + shift_ref[...], 0.0)
    tp = z.shape[0]
    row = lax.broadcasted_iota(jnp.int32, (tp, 1), 0) + pl.program_id(0) * tp
    zm = jnp.where(row < valid_rows, z, 0.0)
    stats_ref[...] = jnp.concatenate(
        [jnp.sum(zm, axis=0, keepdims=True),
         jnp.sum(zm * zm, axis=0, keepdims=True)], axis=0)


def _bn_relu_bn_relu_kernel(y_ref, sc2_ref, sh2_ref, sc3_ref, sh3_ref, out_ref):
    """out = relu(BN3(relu(BN2(y)))) fused: y2 read once, a2 never hits HBM."""
    a = jnp.maximum(y_ref[...] * sc2_ref[...] + sh2_ref[...], 0.0)
    out_ref[...] = jnp.maximum(a * sc3_ref[...] + sh3_ref[...], 0.0)


# ----------------------------------------------------------------------------
# pallas_call wrappers
# ----------------------------------------------------------------------------
def _conv_stats_call(cols, w, tile_p):
    p_pad, k = cols.shape
    cp = w.shape[1]
    n_tiles = p_pad // tile_p
    return pl.pallas_call(
        _conv_stats_kernel,
        grid=(n_tiles,),
        in_specs=[
            pl.BlockSpec((tile_p, k), lambda i: (i, 0)),
            pl.BlockSpec((k, cp), lambda i: (0, 0)),       # weight stays resident
        ],
        out_specs=(
            pl.BlockSpec((tile_p, cp), lambda i: (i, 0)),
            pl.BlockSpec((None, 2, cp), lambda i: (i, 0, 0)),
        ),
        out_shape=(
            jax.ShapeDtypeStruct((p_pad, cp), jnp.float32),
            jax.ShapeDtypeStruct((n_tiles, 2, cp), jnp.float32),
        ),
        compiler_params=pltpu.CompilerParams(
            dimension_semantics=("parallel",),
            vmem_limit_bytes=64 * 1024 * 1024),
    )(cols, w)


def _bn_relu_call(y, scale, shift, tile_p):
    p_pad, cp = y.shape
    n_tiles = p_pad // tile_p
    return pl.pallas_call(
        _bn_relu_kernel,
        grid=(n_tiles,),
        in_specs=[
            pl.BlockSpec((tile_p, cp), lambda i: (i, 0)),
            pl.BlockSpec((1, cp), lambda i: (0, 0)),
            pl.BlockSpec((1, cp), lambda i: (0, 0)),
        ],
        out_specs=pl.BlockSpec((tile_p, cp), lambda i: (i, 0)),
        out_shape=jax.ShapeDtypeStruct((p_pad, cp), jnp.bfloat16),
        compiler_params=pltpu.CompilerParams(
            dimension_semantics=("parallel",)),
    )(y, scale, shift)


def _bn_relu_stats_call(y, scale, shift, tile_p, valid_rows):
    p_pad, cp = y.shape
    n_tiles = p_pad // tile_p
    kern = functools.partial(_bn_relu_stats_kernel, valid_rows=valid_rows)
    return pl.pallas_call(
        kern,
        grid=(n_tiles,),
        in_specs=[
            pl.BlockSpec((tile_p, cp), lambda i: (i, 0)),
            pl.BlockSpec((1, cp), lambda i: (0, 0)),
            pl.BlockSpec((1, cp), lambda i: (0, 0)),
        ],
        out_specs=pl.BlockSpec((None, 2, cp), lambda i: (i, 0, 0)),
        out_shape=jax.ShapeDtypeStruct((n_tiles, 2, cp), jnp.float32),
        compiler_params=pltpu.CompilerParams(
            dimension_semantics=("parallel",)),
    )(y, scale, shift)


def _bn_relu_bn_relu_call(y, sc2, sh2, sc3, sh3, tile_p):
    p_pad, cp = y.shape
    n_tiles = p_pad // tile_p
    return pl.pallas_call(
        _bn_relu_bn_relu_kernel,
        grid=(n_tiles,),
        in_specs=[pl.BlockSpec((tile_p, cp), lambda i: (i, 0))]
        + [pl.BlockSpec((1, cp), lambda i: (0, 0))] * 4,
        out_specs=pl.BlockSpec((tile_p, cp), lambda i: (i, 0)),
        out_shape=jax.ShapeDtypeStruct((p_pad, cp), jnp.float32),
        compiler_params=pltpu.CompilerParams(
            dimension_semantics=("parallel",)),
    )(y, sc2, sh2, sc3, sh3)


# ----------------------------------------------------------------------------
# Wrapper-side glue (XLA): maxpool, im2col, parameter reshapes, BN finalize
# ----------------------------------------------------------------------------
def _im2col(x_nhwc, p_pad):
    """(N,H,W,C) -> (p_pad, 9*C) bf16; K ordered (dy, dx, c) to match _prep_weight."""
    n, h, w, c = x_nhwc.shape
    p = n * h * w
    xp = jnp.pad(x_nhwc, ((0, 0), (1, 1), (1, 1), (0, 0)))
    cols = jnp.concatenate(
        [xp[:, dy:dy + h, dx:dx + w, :].reshape(p, c)
         for dy in range(3) for dx in range(3)], axis=-1)
    cols = jnp.pad(cols, ((0, p_pad - p), (0, 0)))
    return cols.astype(jnp.bfloat16)


def _prep_weight(w_oihw, cp):
    cout, cin = w_oihw.shape[0], w_oihw.shape[1]
    w = jnp.transpose(w_oihw, (2, 3, 1, 0)).reshape(9 * cin, cout)
    return jnp.pad(w, ((0, 0), (0, cp - cout))).astype(jnp.bfloat16)


def _pad_channels(v, cp):
    return jnp.pad(v.astype(jnp.float32), (0, cp - v.shape[0]))


def _bn_affine(partials, gamma_p, beta_p, count):
    """Per-channel scale/shift for training-mode BN from per-tile partial sums."""
    s = jnp.sum(partials[:, 0, :], axis=0)
    ss = jnp.sum(partials[:, 1, :], axis=0)
    mean = s / count
    var = jnp.maximum(ss / count - mean * mean, 0.0)      # biased variance, f32
    scale = gamma_p * lax.rsqrt(var + EPS)
    shift = beta_p - mean * scale
    return scale.reshape(1, -1), shift.reshape(1, -1)


@jax.jit
def down_forward(x_nchw, params):
    """Forward pass of `Down`: MaxPool2d(2) -> DoubleConv -> BatchNorm2d -> ReLU."""
    (w1, b1, g1, be1, w2, b2, g2, be2, g3, be3) = params
    del b1, b2  # conv biases cancel exactly against training-mode BN mean subtraction

    n, cin, h_in, w_in = x_nchw.shape
    cout = w1.shape[0]

    # NCHW -> NHWC once; MaxPool2d(2) (floor mode, as in PyTorch).
    x = jnp.transpose(x_nchw, (0, 2, 3, 1)).astype(jnp.float32)
    h, w = h_in // 2, w_in // 2
    x = x[:, :2 * h, :2 * w, :].reshape(n, h, 2, w, 2, cin).max(axis=(2, 4))

    p = n * h * w
    cp = _round_up(max(cout, LANE), LANE)                    # lane-dense channel dim
    tile_p = min(MAX_TILE_P, _round_up(p, 16))               # 16: bf16 sublane packing
    p_pad = _round_up(p, tile_p)

    g1p, be1p = _pad_channels(g1, cp), _pad_channels(be1, cp)
    g2p, be2p = _pad_channels(g2, cp), _pad_channels(be2, cp)
    g3p, be3p = _pad_channels(g3, cp), _pad_channels(be3, cp)

    # ---- DoubleConv, first half: conv1 -> BN1 -> ReLU (activation stored bf16) ----
    cols1 = _im2col(x, p_pad)
    y1, p1 = _conv_stats_call(cols1, _prep_weight(w1, cp), tile_p)
    sc1, sh1 = _bn_affine(p1, g1p, be1p, p)
    a1 = _bn_relu_call(y1, sc1, sh1, tile_p)                 # bf16

    # ---- DoubleConv, second half: conv2 -> BN2 stats ----
    a1_img = a1[:p, :cout].reshape(n, h, w, cout)
    cols2 = _im2col(a1_img, p_pad)
    y2, p2 = _conv_stats_call(cols2, _prep_weight(w2, cp), tile_p)
    sc2, sh2 = _bn_affine(p2, g2p, be2p, p)

    # ---- BN3 partials from relu(BN2(y2)) without materializing a2 ----
    p3 = _bn_relu_stats_call(y2, sc2, sh2, tile_p, p)
    sc3, sh3 = _bn_affine(p3, g3p, be3p, p)

    # ---- fused BN2 -> ReLU -> BN3 -> ReLU, single read of y2, single write ----
    out = _bn_relu_bn_relu_call(y2, sc2, sh2, sc3, sh3, tile_p)

    out = out[:p, :cout].reshape(n, h, w, cout)
    return jnp.transpose(out, (0, 3, 1, 2))                  # back to NCHW


# ----------------------------------------------------------------------------
# Pure-JAX reference (PyTorch train-mode semantics)
# ----------------------------------------------------------------------------
def _reference(x_nchw, params, matmul_dtype=jnp.float32):
    """Reference Down.forward(). matmul_dtype=bfloat16 mirrors the kernel's MXU
    input precision (accumulation stays f32 in both) for a tight comparison."""
    (w1, b1, g1, be1, w2, b2, g2, be2, g3, be3) = params
    x = x_nchw.astype(jnp.float32)
    n, c, h, w = x.shape
    x = x[:, :, :2 * (h // 2), :2 * (w // 2)]
    x = x.reshape(n, c, h // 2, 2, w // 2, 2).max(axis=(3, 5))      # MaxPool2d(2)

    def conv(v, wt, b):
        vc = v.astype(matmul_dtype).astype(jnp.float32)
        wc = wt.astype(matmul_dtype).astype(jnp.float32)
        y = lax.conv_general_dilated(
            vc, wc, window_strides=(1, 1), padding=((1, 1), (1, 1)),
            dimension_numbers=("NCHW", "OIHW", "NCHW"))
        return y + b[None, :, None, None]

    def bn(v, g, b):
        mean = jnp.mean(v, axis=(0, 2, 3), keepdims=True)
        var = jnp.mean((v - mean) ** 2, axis=(0, 2, 3), keepdims=True)
        return (v - mean) * lax.rsqrt(var + EPS) * g[None, :, None, None] \
            + b[None, :, None, None]

    x = jnp.maximum(bn(conv(x, w1, b1), g1, be1), 0.0)
    x = jnp.maximum(bn(conv(x, w2, b2), g2, be2), 0.0)
    return jnp.maximum(bn(x, g3, be3), 0.0)


if __name__ == "__main__":
    N, Cin, Cout, H, W = 2, 4, 8, 16, 16

    key = jax.random.PRNGKey(0)
    kx, k1, k2, k3, k4, k5 = jax.random.split(key, 6)

    x = jax.random.normal(kx, (N, Cin, H, W), dtype=jnp.float32)

    def conv_init(k, cin, cout):
        kw, kb = jax.random.split(k)
        bound = 1.0 / (cin * 9) ** 0.5
        wt = jax.random.uniform(kw, (cout, cin, 3, 3), jnp.float32, -bound, bound)
        b = jax.random.uniform(kb, (cout,), jnp.float32, -bound, bound)
        return wt, b

    def bn_init(k, c):
        kg, kb = jax.random.split(k)
        return (1.0 + 0.1 * jax.random.normal(kg, (c,), jnp.float32),
                0.1 * jax.random.normal(kb, (c,), jnp.float32))

    w1, b1 = conv_init(k1, Cin, Cout)
    g1, be1 = bn_init(k2, Cout)
    w2, b2 = conv_init(k3, Cout, Cout)
    g2, be2 = bn_init(k4, Cout)
    g3, be3 = bn_init(k5, Cout)
    params = (w1, b1, g1, be1, w2, b2, g2, be2, g3, be3)

    out = jax.block_until_ready(down_forward(x, params))
    assert out.shape == (N, Cout, H // 2, W // 2), out.shape

    # Tight check vs. a reference with the same MXU input precision (bf16 operands,
    # f32 accumulation / f32 BN math) -- verifies kernel math incl. bias cancellation.
    ref_matched = _reference(x, params, jnp.bfloat16)
    err_matched = float(jnp.max(jnp.abs(out - ref_matched)))
    assert jnp.allclose(out, ref_matched, atol=5e-3, rtol=5e-3), err_matched

    # Coarse sanity bound vs. the strict float32 reference (difference is purely
    # the bf16 cast of the MXU operands).
    ref_f32 = _reference(x, params, jnp.float32)
    err_f32 = float(jnp.max(jnp.abs(out - ref_f32)))
    assert err_f32 < 0.1, err_f32

    print("KERNEL_OK")
</pallas_src>

<mosaic_0001>
module attributes {stable_mosaic.version = 11 : i64} {
  func.func @_conv_stats_kernel(%arg0: i32, %arg1: memref<128x36xbf16, #tpu.memory_space<vmem>>, %arg2: memref<36x128xbf16, #tpu.memory_space<vmem>>, %arg3: memref<128x128xf32, #tpu.memory_space<vmem>>, %arg4: memref<1x2x128xf32, #tpu.memory_space<vmem>>) attributes {dimension_semantics = [#tpu.dimension_semantics<parallel>], iteration_bounds = array<i64: 1>, scalar_prefetch = 0 : i64, scratch_operands = 0 : i64, tpu.core_type = #tpu.core_type<tc>, window_params = [{transform_indices = @transform_0, window_bounds = array<i64: 128, 36>}, {pipeline_mode = #tpu.pipeline_mode<synchronous>, transform_indices = @transform_1, window_bounds = array<i64: 36, 128>}, {transform_indices = @transform_2, window_bounds = array<i64: 128, 128>}, {transform_indices = @transform_3, window_bounds = array<i64: 1, 2, 128>}]} {
    %c0 = arith.constant 0 : index
    %c0_0 = arith.constant 0 : index
    %0 = vector.load %arg1[%c0, %c0_0] : memref<128x36xbf16, #tpu.memory_space<vmem>>, vector<128x36xbf16>
    %c0_1 = arith.constant 0 : index
    %c0_2 = arith.constant 0 : index
    %1 = vector.load %arg2[%c0_1, %c0_2] : memref<36x128xbf16, #tpu.memory_space<vmem>>, vector<36x128xbf16>
    %cst = arith.constant dense<0.000000e+00> : vector<128x128xf32>
    %2 = tpu.matmul %0, %1, %cst {dimension_numbers = #tpu.dot_dimension_numbers<[1], [0], [0], [1], [0, 0, 1, 1], [], []>} : vector<128x36xbf16>, vector<36x128xbf16>, vector<128x128xf32> -> vector<128x128xf32>
    %c0_3 = arith.constant 0 : index
    %c0_4 = arith.constant 0 : index
    %3 = vector.load %arg3[%c0_3, %c0_4] : memref<128x128xf32, #tpu.memory_space<vmem>>, vector<128x128xf32>
    tpu.vector_store %arg3[%c0_3, %c0_4], %2 {strides = array<i32>} : memref<128x128xf32, #tpu.memory_space<vmem>>, vector<128x128xf32>,
    %cst_5 = arith.constant dense<0.000000e+00> : vector<128xf32>
    %4 = vector.multi_reduction <add>, %2, %cst_5 [0] : vector<128x128xf32> to vector<128xf32>
    %5 = vector.shape_cast %4 : vector<128xf32> to vector<1x128xf32>
    %6 = arith.mulf %2, %2 : vector<128x128xf32>
    %cst_6 = arith.constant dense<0.000000e+00> : vector<128xf32>
    %7 = vector.multi_reduction <add>, %6, %cst_6 [0] : vector<128x128xf32> to vector<128xf32>
    %8 = vector.shape_cast %7 : vector<128xf32> to vector<1x128xf32>
    %9 = tpu.concatenate %5, %8 in 0 : vector<1x128xf32>, vector<1x128xf32> -> vector<2x128xf32>
    %c0_7 = arith.constant 0 : index
    %c0_8 = arith.constant 0 : index
    %c0_9 = arith.constant 0 : index
    %10 = vector.load %arg4[%c0_7, %c0_8, %c0_9] : memref<1x2x128xf32, #tpu.memory_space<vmem>>, vector<1x2x128xf32>
    %11 = vector.shape_cast %10 : vector<1x2x128xf32> to vector<2x128xf32>
    %12 = vector.shape_cast %9 : vector<2x128xf32> to vector<1x2x128xf32>
    tpu.vector_store %arg4[%c0_7, %c0_8, %c0_9], %12 {strides = array<i32>} : memref<1x2x128xf32, #tpu.memory_space<vmem>>, vector<1x2x128xf32>,
    return
  }
  func.func @transform_0(%arg0: i32) -> (i32, i32) {
    %c0_i32 = arith.constant 0 : i32
    %c0_i32_0 = arith.constant 0 : i32
    return %arg0, %c0_i32 : i32, i32
  }
  func.func @transform_1(%arg0: i32) -> (i32, i32) {
    %c0_i32 = arith.constant 0 : i32
    %c0_i32_0 = arith.constant 0 : i32
    %c0_i32_1 = arith.constant 0 : i32
    return %c0_i32, %c0_i32_0 : i32, i32
  }
  func.func @transform_2(%arg0: i32) -> (i32, i32) {
    %c0_i32 = arith.constant 0 : i32
    %c0_i32_0 = arith.constant 0 : i32
    return %arg0, %c0_i32 : i32, i32
  }
  func.func @transform_3(%arg0: i32) -> (i32, i32, i32) {
    %c0_i32 = arith.constant 0 : i32
    %c0_i32_0 = arith.constant 0 : i32
    %c0_i32_1 = arith.constant 0 : i32
    return %arg0, %c0_i32, %c0_i32_0 : i32, i32, i32
  }
}

module attributes {stable_mosaic.version = 11 : i64} {
  func.func @_bn_relu_kernel(%arg0: i32, %arg1: memref<128x128xf32, #tpu.memory_space<vmem>>, %arg2: memref<1x128xf32, #tpu.memory_space<vmem>>, %arg3: memref<1x128xf32, #tpu.memory_space<vmem>>, %arg4: memref<128x128xbf16, #tpu.memory_space<vmem>>) attributes {dimension_semantics = [#tpu.dimension_semantics<parallel>], iteration_bounds = array<i64: 1>, scalar_prefetch = 0 : i64, scratch_operands = 0 : i64, tpu.core_type = #tpu.core_type<tc>, window_params = [{transform_indices = @transform_0, window_bounds = array<i64: 128, 128>}, {pipeline_mode = #tpu.pipeline_mode<synchronous>, transform_indices = @transform_1, window_bounds = array<i64: 1, 128>}, {pipeline_mode = #tpu.pipeline_mode<synchronous>, transform_indices = @transform_2, window_bounds = array<i64: 1, 128>}, {transform_indices = @transform_3, window_bounds = array<i64: 128, 128>}]} {
    %c0 = arith.constant 0 : index
    %c0_0 = arith.constant 0 : index
    %0 = vector.load %arg1[%c0, %c0_0] : memref<128x128xf32, #tpu.memory_space<vmem>>, vector<128x128xf32>
    %c0_1 = arith.constant 0 : index
    %c0_2 = arith.constant 0 : index
    %1 = vector.load %arg2[%c0_1, %c0_2] : memref<1x128xf32, #tpu.memory_space<vmem>>, vector<1x128xf32>
    %2 = vector.broadcast %1 : vector<1x128xf32> to vector<128x128xf32>
    %3 = arith.mulf %0, %2 : vector<128x128xf32>
    %c0_3 = arith.constant 0 : index
    %c0_4 = arith.constant 0 : index
    %4 = vector.load %arg3[%c0_3, %c0_4] : memref<1x128xf32, #tpu.memory_space<vmem>>, vector<1x128xf32>
    %5 = vector.broadcast %4 : vector<1x128xf32> to vector<128x128xf32>
    %6 = arith.addf %3, %5 : vector<128x128xf32>
    %cst = arith.constant 0.000000e+00 : f32
    %7 = vector.broadcast %cst : f32 to vector<128x128xf32>
    %8 = arith.maximumf %6, %7 : vector<128x128xf32>
    %9 = arith.truncf %8 : vector<128x128xf32> to vector<128x128xbf16>
    %c0_5 = arith.constant 0 : index
    %c0_6 = arith.constant 0 : index
    %10 = vector.load %arg4[%c0_5, %c0_6] : memref<128x128xbf16, #tpu.memory_space<vmem>>, vector<128x128xbf16>
    tpu.vector_store %arg4[%c0_5, %c0_6], %9 {strides = array<i32>} : memref<128x128xbf16, #tpu.memory_space<vmem>>, vector<128x128xbf16>,
    return
  }
  func.func @transform_0(%arg0: i32) -> (i32, i32) {
    %c0_i32 = arith.constant 0 : i32
    %c0_i32_0 = arith.constant 0 : i32
    return %arg0, %c0_i32 : i32, i32
  }
  func.func @transform_1(%arg0: i32) -> (i32, i32) {
    %c0_i32 = arith.constant 0 : i32
    %c0_i32_0 = arith.constant 0 : i32
    %c0_i32_1 = arith.constant 0 : i32
    return %c0_i32, %c0_i32_0 : i32, i32
  }
  func.func @transform_2(%arg0: i32) -> (i32, i32) {
    %c0_i32 = arith.constant 0 : i32
    %c0_i32_0 = arith.constant 0 : i32
    %c0_i32_1 = arith.constant 0 : i32
    return %c0_i32, %c0_i32_0 : i32, i32
  }
  func.func @transform_3(%arg0: i32) -> (i32, i32) {
    %c0_i32 = arith.constant 0 : i32
    %c0_i32_0 = arith.constant 0 : i32
    return %arg0, %c0_i32 : i32, i32
  }
}

module attributes {stable_mosaic.version = 11 : i64} {
  func.func @_conv_stats_kernel(%arg0: i32, %arg1: memref<128x72xbf16, #tpu.memory_space<vmem>>, %arg2: memref<72x128xbf16, #tpu.memory_space<vmem>>, %arg3: memref<128x128xf32, #tpu.memory_space<vmem>>, %arg4: memref<1x2x128xf32, #tpu.memory_space<vmem>>) attributes {dimension_semantics = [#tpu.dimension_semantics<parallel>], iteration_bounds = array<i64: 1>, scalar_prefetch = 0 : i64, scratch_operands = 0 : i64, tpu.core_type = #tpu.core_type<tc>, window_params = [{transform_indices = @transform_0, window_bounds = array<i64: 128, 72>}, {pipeline_mode = #tpu.pipeline_mode<synchronous>, transform_indices = @transform_1, window_bounds = array<i64: 72, 128>}, {transform_indices = @transform_2, window_bounds = array<i64: 128, 128>}, {transform_indices = @transform_3, window_bounds = array<i64: 1, 2, 128>}]} {
    %c0 = arith.constant 0 : index
    %c0_0 = arith.constant 0 : index
    %0 = vector.load %arg1[%c0, %c0_0] : memref<128x72xbf16, #tpu.memory_space<vmem>>, vector<128x72xbf16>
    %c0_1 = arith.constant 0 : index
    %c0_2 = arith.constant 0 : index
    %1 = vector.load %arg2[%c0_1, %c0_2] : memref<72x128xbf16, #tpu.memory_space<vmem>>, vector<72x128xbf16>
    %cst = arith.constant dense<0.000000e+00> : vector<128x128xf32>
    %2 = tpu.matmul %0, %1, %cst {dimension_numbers = #tpu.dot_dimension_numbers<[1], [0], [0], [1], [0, 0, 1, 1], [], []>} : vector<128x72xbf16>, vector<72x128xbf16>, vector<128x128xf32> -> vector<128x128xf32>
    %c0_3 = arith.constant 0 : index
    %c0_4 = arith.constant 0 : index
    %3 = vector.load %arg3[%c0_3, %c0_4] : memref<128x128xf32, #tpu.memory_space<vmem>>, vector<128x128xf32>
    tpu.vector_store %arg3[%c0_3, %c0_4], %2 {strides = array<i32>} : memref<128x128xf32, #tpu.memory_space<vmem>>, vector<128x128xf32>,
    %cst_5 = arith.constant dense<0.000000e+00> : vector<128xf32>
    %4 = vector.multi_reduction <add>, %2, %cst_5 [0] : vector<128x128xf32> to vector<128xf32>
    %5 = vector.shape_cast %4 : vector<128xf32> to vector<1x128xf32>
    %6 = arith.mulf %2, %2 : vector<128x128xf32>
    %cst_6 = arith.constant dense<0.000000e+00> : vector<128xf32>
    %7 = vector.multi_reduction <add>, %6, %cst_6 [0] : vector<128x128xf32> to vector<128xf32>
    %8 = vector.shape_cast %7 : vector<128xf32> to vector<1x128xf32>
    %9 = tpu.concatenate %5, %8 in 0 : vector<1x128xf32>, vector<1x128xf32> -> vector<2x128xf32>
    %c0_7 = arith.constant 0 : index
    %c0_8 = arith.constant 0 : index
    %c0_9 = arith.constant 0 : index
    %10 = vector.load %arg4[%c0_7, %c0_8, %c0_9] : memref<1x2x128xf32, #tpu.memory_space<vmem>>, vector<1x2x128xf32>
    %11 = vector.shape_cast %10 : vector<1x2x128xf32> to vector<2x128xf32>
    %12 = vector.shape_cast %9 : vector<2x128xf32> to vector<1x2x128xf32>
    tpu.vector_store %arg4[%c0_7, %c0_8, %c0_9], %12 {strides = array<i32>} : memref<1x2x128xf32, #tpu.memory_space<vmem>>, vector<1x2x128xf32>,
    return
  }
  func.func @transform_0(%arg0: i32) -> (i32, i32) {
    %c0_i32 = arith.constant 0 : i32
    %c0_i32_0 = arith.constant 0 : i32
    return %arg0, %c0_i32 : i32, i32
  }
  func.func @transform_1(%arg0: i32) -> (i32, i32) {
    %c0_i32 = arith.constant 0 : i32
    %c0_i32_0 = arith.constant 0 : i32
    %c0_i32_1 = arith.constant 0 : i32
    return %c0_i32, %c0_i32_0 : i32, i32
  }
  func.func @transform_2(%arg0: i32) -> (i32, i32) {
    %c0_i32 = arith.constant 0 : i32
    %c0_i32_0 = arith.constant 0 : i32
    return %arg0, %c0_i32 : i32, i32
  }
  func.func @transform_3(%arg0: i32) -> (i32, i32, i32) {
    %c0_i32 = arith.constant 0 : i32
    %c0_i32_0 = arith.constant 0 : i32
    %c0_i32_1 = arith.constant 0 : i32
    return %arg0, %c0_i32, %c0_i32_0 : i32, i32, i32
  }
}

module attributes {stable_mosaic.version = 11 : i64} {
  func.func @_bn_relu_bn_relu_kernel(%arg0: i32, %arg1: memref<128x128xf32, #tpu.memory_space<vmem>>, %arg2: memref<1x128xf32, #tpu.memory_space<vmem>>, %arg3: memref<1x128xf32, #tpu.memory_space<vmem>>, %arg4: memref<1x128xf32, #tpu.memory_space<vmem>>, %arg5: memref<1x128xf32, #tpu.memory_space<vmem>>, %arg6: memref<128x128xf32, #tpu.memory_space<vmem>>) attributes {dimension_semantics = [#tpu.dimension_semantics<parallel>], iteration_bounds = array<i64: 1>, scalar_prefetch = 0 : i64, scratch_operands = 0 : i64, tpu.core_type = #tpu.core_type<tc>, window_params = [{transform_indices = @transform_0, window_bounds = array<i64: 128, 128>}, {pipeline_mode = #tpu.pipeline_mode<synchronous>, transform_indices = @transform_1, window_bounds = array<i64: 1, 128>}, {pipeline_mode = #tpu.pipeline_mode<synchronous>, transform_indices = @transform_2, window_bounds = array<i64: 1, 128>}, {pipeline_mode = #tpu.pipeline_mode<synchronous>, transform_indices = @transform_3, window_bounds = array<i64: 1, 128>}, {pipeline_mode = #tpu.pipeline_mode<synchronous>, transform_indices = @transform_4, window_bounds = array<i64: 1, 128>}, {transform_indices = @transform_5, window_bounds = array<i64: 128, 128>}]} {
    %c0 = arith.constant 0 : index
    %c0_0 = arith.constant 0 : index
    %0 = vector.load %arg1[%c0, %c0_0] : memref<128x128xf32, #tpu.memory_space<vmem>>, vector<128x128xf32>
    %c0_1 = arith.constant 0 : index
    %c0_2 = arith.constant 0 : index
    %1 = vector.load %arg2[%c0_1, %c0_2] : memref<1x128xf32, #tpu.memory_space<vmem>>, vector<1x128xf32>
    %2 = vector.broadcast %1 : vector<1x128xf32> to vector<128x128xf32>
    %3 = arith.mulf %0, %2 : vector<128x128xf32>
    %c0_3 = arith.constant 0 : index
    %c0_4 = arith.constant 0 : index
    %4 = vector.load %arg3[%c0_3, %c0_4] : memref<1x128xf32, #tpu.memory_space<vmem>>, vector<1x128xf32>
    %5 = vector.broadcast %4 : vector<1x128xf32> to vector<128x128xf32>
    %6 = arith.addf %3, %5 : vector<128x128xf32>
    %cst = arith.constant 0.000000e+00 : f32
    %7 = vector.broadcast %cst : f32 to vector<128x128xf32>
    %8 = arith.maximumf %6, %7 : vector<128x128xf32>
    %c0_5 = arith.constant 0 : index
    %c0_6 = arith.constant 0 : index
    %9 = vector.load %arg4[%c0_5, %c0_6] : memref<1x128xf32, #tpu.memory_space<vmem>>, vector<1x128xf32>
    %10 = vector.broadcast %9 : vector<1x128xf32> to vector<128x128xf32>
    %11 = arith.mulf %8, %10 : vector<128x128xf32>
    %c0_7 = arith.constant 0 : index
    %c0_8 = arith.constant 0 : index
    %12 = vector.load %arg5[%c0_7, %c0_8] : memref<1x128xf32, #tpu.memory_space<vmem>>, vector<1x128xf32>
    %13 = vector.broadcast %12 : vector<1x128xf32> to vector<128x128xf32>
    %14 = arith.addf %11, %13 : vector<128x128xf32>
    %cst_9 = arith.constant 0.000000e+00 : f32
    %15 = vector.broadcast %cst_9 : f32 to vector<128x128xf32>
    %16 = arith.maximumf %14, %15 : vector<128x128xf32>
    %c0_10 = arith.constant 0 : index
    %c0_11 = arith.constant 0 : index
    %17 = vector.load %arg6[%c0_10, %c0_11] : memref<128x128xf32, #tpu.memory_space<vmem>>, vector<128x128xf32>
    tpu.vector_store %arg6[%c0_10, %c0_11], %16 {strides = array<i32>} : memref<128x128xf32, #tpu.memory_space<vmem>>, vector<128x128xf32>,
    return
  }
  func.func @transform_0(%arg0: i32) -> (i32, i32) {
    %c0_i32 = arith.constant 0 : i32
    %c0_i32_0 = arith.constant 0 : i32
    return %arg0, %c0_i32 : i32, i32
  }
  func.func @transform_1(%arg0: i32) -> (i32, i32) {
    %c0_i32 = arith.constant 0 : i32
    %c0_i32_0 = arith.constant 0 : i32
    %c0_i32_1 = arith.constant 0 : i32
    return %c0_i32, %c0_i32_0 : i32, i32
  }
  func.func @transform_2(%arg0: i32) -> (i32, i32) {
    %c0_i32 = arith.constant 0 : i32
    %c0_i32_0 = arith.constant 0 : i32
    %c0_i32_1 = arith.constant 0 : i32
    return %c0_i32, %c0_i32_0 : i32, i32
  }
  func.func @transform_3(%arg0: i32) -> (i32, i32) {
    %c0_i32 = arith.constant 0 : i32
    %c0_i32_0 = arith.constant 0 : i32
    %c0_i32_1 = arith.constant 0 : i32
    return %c0_i32, %c0_i32_0 : i32, i32
  }
  func.func @transform_4(%arg0: i32) -> (i32, i32) {
    %c0_i32 = arith.constant 0 : i32
    %c0_i32_0 = arith.constant 0 : i32
    %c0_i32_1 = arith.constant 0 : i32
    return %c0_i32, %c0_i32_0 : i32, i32
  }
  func.func @transform_5(%arg0: i32) -> (i32, i32) {
    %c0_i32 = arith.constant 0 : i32
    %c0_i32_0 = arith.constant 0 : i32
    return %arg0, %c0_i32 : i32, i32
  }
}

module attributes {stable_mosaic.version = 11 : i64} {
  func.func @_bn_relu_stats_kernel(%arg0: i32, %arg1: memref<128x128xf32, #tpu.memory_space<vmem>>, %arg2: memref<1x128xf32, #tpu.memory_space<vmem>>, %arg3: memref<1x128xf32, #tpu.memory_space<vmem>>, %arg4: memref<1x2x128xf32, #tpu.memory_space<vmem>>) attributes {dimension_semantics = [#tpu.dimension_semantics<parallel>], iteration_bounds = array<i64: 1>, scalar_prefetch = 0 : i64, scratch_operands = 0 : i64, tpu.core_type = #tpu.core_type<tc>, window_params = [{transform_indices = @transform_0, window_bounds = array<i64: 128, 128>}, {pipeline_mode = #tpu.pipeline_mode<synchronous>, transform_indices = @transform_1, window_bounds = array<i64: 1, 128>}, {pipeline_mode = #tpu.pipeline_mode<synchronous>, transform_indices = @transform_2, window_bounds = array<i64: 1, 128>}, {transform_indices = @transform_3, window_bounds = array<i64: 1, 2, 128>}]} {
    %c0 = arith.constant 0 : index
    %c0_0 = arith.constant 0 : index
    %0 = vector.load %arg1[%c0, %c0_0] : memref<128x128xf32, #tpu.memory_space<vmem>>, vector<128x128xf32>
    %c0_1 = arith.constant 0 : index
    %c0_2 = arith.constant 0 : index
    %1 = vector.load %arg2[%c0_1, %c0_2] : memref<1x128xf32, #tpu.memory_space<vmem>>, vector<1x128xf32>
    %2 = vector.broadcast %1 : vector<1x128xf32> to vector<128x128xf32>
    %3 = arith.mulf %0, %2 : vector<128x128xf32>
    %c0_3 = arith.constant 0 : index
    %c0_4 = arith.constant 0 : index
    %4 = vector.load %arg3[%c0_3, %c0_4] : memref<1x128xf32, #tpu.memory_space<vmem>>, vector<1x128xf32>
    %5 = vector.broadcast %4 : vector<1x128xf32> to vector<128x128xf32>
    %6 = arith.addf %3, %5 : vector<128x128xf32>
    %cst = arith.constant 0.000000e+00 : f32
    %7 = vector.broadcast %cst : f32 to vector<128x128xf32>
    %8 = arith.maximumf %6, %7 : vector<128x128xf32>
    %9 = tpu.iota {dimensions = array<i32: 0>} : vector<128x1xi32>
    %c128_i32 = arith.constant 128 : i32
    %10 = arith.muli %arg0, %c128_i32 : i32
    %11 = vector.broadcast %10 : i32 to vector<128x1xi32>
    %12 = arith.addi %9, %11 : vector<128x1xi32>
    %c128_i32_5 = arith.constant 128 : i32
    %13 = vector.broadcast %c128_i32_5 : i32 to vector<128x1xi32>
    %14 = arith.cmpi slt, %12, %13 : vector<128x1xi32>
    %cst_6 = arith.constant 0.000000e+00 : f32
    %15 = vector.shape_cast %14 : vector<128x1xi1> to vector<128x1xi1>
    %16 = vector.broadcast %15 : vector<128x1xi1> to vector<128x128xi1>
    %17 = vector.broadcast %cst_6 : f32 to vector<128x128xf32>
    %18 = arith.select %16, %8, %17 : vector<128x128xi1>, vector<128x128xf32>
    %cst_7 = arith.constant dense<0.000000e+00> : vector<128xf32>
    %19 = vector.multi_reduction <add>, %18, %cst_7 [0] : vector<128x128xf32> to vector<128xf32>
    %20 = vector.shape_cast %19 : vector<128xf32> to vector<1x128xf32>
    %21 = arith.mulf %18, %18 : vector<128x128xf32>
    %cst_8 = arith.constant dense<0.000000e+00> : vector<128xf32>
    %22 = vector.multi_reduction <add>, %21, %cst_8 [0] : vector<128x128xf32> to vector<128xf32>
    %23 = vector.shape_cast %22 : vector<128xf32> to vector<1x128xf32>
    %24 = tpu.concatenate %20, %23 in 0 : vector<1x128xf32>, vector<1x128xf32> -> vector<2x128xf32>
    %c0_9 = arith.constant 0 : index
    %c0_10 = arith.constant 0 : index
    %c0_11 = arith.constant 0 : index
    %25 = vector.load %arg4[%c0_9, %c0_10, %c0_11] : memref<1x2x128xf32, #tpu.memory_space<vmem>>, vector<1x2x128xf32>
    %26 = vector.shape_cast %25 : vector<1x2x128xf32> to vector<2x128xf32>
    %27 = vector.shape_cast %24 : vector<2x128xf32> to vector<1x2x128xf32>
    tpu.vector_store %arg4[%c0_9, %c0_10, %c0_11], %27 {strides = array<i32>} : memref<1x2x128xf32, #tpu.memory_space<vmem>>, vector<1x2x128xf32>,
    return
  }
  func.func @transform_0(%arg0: i32) -> (i32, i32) {
    %c0_i32 = arith.constant 0 : i32
    %c0_i32_0 = arith.constant 0 : i32
    return %arg0, %c0_i32 : i32, i32
  }
  func.func @transform_1(%arg0: i32) -> (i32, i32) {
    %c0_i32 = arith.constant 0 : i32
    %c0_i32_0 = arith.constant 0 : i32
    %c0_i32_1 = arith.constant 0 : i32
    return %c0_i32, %c0_i32_0 : i32, i32
  }
  func.func @transform_2(%arg0: i32) -> (i32, i32) {
    %c0_i32 = arith.constant 0 : i32
    %c0_i32_0 = arith.constant 0 : i32
    %c0_i32_1 = arith.constant 0 : i32
    return %c0_i32, %c0_i32_0 : i32, i32
  }
  func.func @transform_3(%arg0: i32) -> (i32, i32, i32) {
    %c0_i32 = arith.constant 0 : i32
    %c0_i32_0 = arith.constant 0 : i32
    %c0_i32_1 = arith.constant 0 : i32
    return %arg0, %c0_i32, %c0_i32_0 : i32, i32, i32
  }
}

</mosaic_0001>

<llo_original>
// kernel: down_forward.6
$region0: #{down_forward.6}
  #allocation0 [shape = 'u32[]', space=smem, size = 0x4, offset = 0x4, fixed_abs, tag = 'smem constant byte address 0x4 - core index']
  #allocation1 [shape = 'u32[144,128]{1,0:T(1,128)}', space=vmem, size = 0x12000, scoped, tag = 'internal scratch']
  %s0 = inlined_call_operand.hbm [shape: f32[128,128], index: 0, kind: input, shape index: {}]
  %s1 = inlined_call_operand.vmem [shape: f32[1,128], index: 1, kind: input, shape index: {}]
  %s2 = inlined_call_operand.vmem [shape: f32[1,128], index: 2, kind: input, shape index: {}]
  %s3 = inlined_call_operand.vmem [shape: bf16[128,128], index: 3, kind: output, shape index: {}]
  %s4 = sld [smem:[#allocation0]]
  $region26: #{down_forward.6} parent=0
    _
  %s6 = ssub.s32 1, %s4
  %s7 = scalar_select 0, %s6, %s4
  $region1: #{down_forward.6} parent=0
    #allocation2 [shape = 'u8[65536]{0}', space=vmem, size = 0x10000, scoped, tag = 'input window, operand 0, single buffered']
    #allocation3 [shape = 's32[1]{0}', space=sflag, size = 0x4, scoped, tag = 'scoped memory for down_forward.6']
    %8 = vsyncpa [#allocation3], 0
    // Predicated region
    $region2: #{down_forward.6} parent=1 // pred_check
      _
    $region3: #{down_forward.6} parent=1 // pred_check_branch
      %10 = sbr.rel (0) target = $region5
    $region4: #{down_forward.6} parent=1 // pred_region
      %s12 = ssub.s32 2048, 2048
      %13 = vsyncadd [#allocation3], %s12
      %s14 = sshll.u32 [#allocation2], 4
      %s15 = int_to_ptr.vmem [resolvable:$true] %s14
      %20 = dma.hbm_to_vmem [thread:$0]  %s0, 2048, %s15, [#allocation3], 128, 128, 8
    $region5: #{down_forward.6} parent=1 // pred_fallthru
      _
    // Predicated region
    $region6: #{down_forward.6} parent=1 // pred_check
      _
    $region7: #{down_forward.6} parent=1 // pred_check_branch
      %22 = sbr.rel (0) target = $region9
    $region8: #{down_forward.6} parent=1 // pred_region
      _
    $region9: #{down_forward.6} parent=1 // pred_fallthru
      _
    // Predicated region
    $region10: #{down_forward.6} parent=1 // pred_check
      _
    $region11: #{down_forward.6} parent=1 // pred_check_branch
      %24 = sbr.rel (0) target = $region13
    $region12: #{down_forward.6} parent=1 // pred_region
      _
    $region13: #{down_forward.6} parent=1 // pred_fallthru
      _
    // Predicated region
    $region14: #{down_forward.6} parent=1 // pred_check
      _
    $region15: #{down_forward.6} parent=1 // pred_check_branch
      %26 = sbr.rel (0) target = $region17
    $region16: #{down_forward.6} parent=1 // pred_region
      %27 = dma.done [#allocation3], 2048
    $region17: #{down_forward.6} parent=1 // pred_fallthru
      _
    %v28 = vld [vmem:[#allocation2] sm:$0xff]
    %v29 = vld [vmem:[#allocation2 + $0x8] sm:$0xff]
    %v30 = vld [vmem:[#allocation2 + $0x10] sm:$0xff]
    %v31 = vld [vmem:[#allocation2 + $0x18] sm:$0xff]
    %v32 = vld [vmem:[#allocation2 + $0x20] sm:$0xff]
    %v33 = vld [vmem:[#allocation2 + $0x28] sm:$0xff]
    %v34 = vld [vmem:[#allocation2 + $0x30] sm:$0xff]
    %v35 = vld [vmem:[#allocation2 + $0x38] sm:$0xff]
    %v36 = vld [vmem:[#allocation2 + $0x40] sm:$0xff]
    %v37 = vld [vmem:[#allocation2 + $0x48] sm:$0xff]
    %v38 = vld [vmem:[#allocation2 + $0x50] sm:$0xff]
    %v39 = vld [vmem:[#allocation2 + $0x58] sm:$0xff]
    %v40 = vld [vmem:[#allocation2 + $0x60] sm:$0xff]
    %v41 = vld [vmem:[#allocation2 + $0x68] sm:$0xff]
    %v42 = vld [vmem:[#allocation2 + $0x70] sm:$0xff]
    %v43 = vld [vmem:[#allocation2 + $0x78] sm:$0xff]
    %v44 = vld [vmem:[%s1] sm:$0x1]
    %v46 = vlaneseq
    %v47 = vshrl.u32 %v46, 7
    %v48 = vsub.s32 0, %v47
    %v49 = vrot.slane %v44, %v48
    %v51 = vmul.f32 %v28, %v49
    %v52 = vmul.f32 %v29, %v49
    %v53 = vmul.f32 %v30, %v49
    %v54 = vmul.f32 %v31, %v49
    %v55 = vmul.f32 %v32, %v49
    %v56 = vmul.f32 %v33, %v49
    %v57 = vmul.f32 %v34, %v49
    %v58 = vmul.f32 %v35, %v49
    %v59 = vmul.f32 %v36, %v49
    %v60 = vmul.f32 %v37, %v49
    %v61 = vmul.f32 %v38, %v49
    %v62 = vmul.f32 %v39, %v49
    %v63 = vmul.f32 %v40, %v49
    %v64 = vmul.f32 %v41, %v49
    %v65 = vmul.f32 %v42, %v49
    %v66 = vmul.f32 %v43, %v49
    %v67 = vld [vmem:[%s2] sm:$0x1]
    %v69 = vlaneseq
    %v70 = vshrl.u32 %v69, 7
    %v71 = vsub.s32 0, %v70
    %v72 = vrot.slane %v67, %v71
    %v74 = vadd.f32 %v51, %v72
    %v75 = vadd.f32 %v52, %v72
    %v76 = vadd.f32 %v53, %v72
    %v77 = vadd.f32 %v54, %v72
    %v78 = vadd.f32 %v55, %v72
    %v79 = vadd.f32 %v56, %v72
    %v80 = vadd.f32 %v57, %v72
    %v81 = vadd.f32 %v58, %v72
    %v82 = vadd.f32 %v59, %v72
    %v83 = vadd.f32 %v60, %v72
    %v84 = vadd.f32 %v61, %v72
    %v85 = vadd.f32 %v62, %v72
    %v86 = vadd.f32 %v63, %v72
    %v87 = vadd.f32 %v64, %v72
    %v88 = vadd.f32 %v65, %v72
    %v89 = vadd.f32 %v66, %v72
    %v90 = vmax.f32 %v74, 0.0
    %v91 = vmax.f32 %v75, 0.0
    %v92 = vmax.f32 %v76, 0.0
    %v93 = vmax.f32 %v77, 0.0
    %v94 = vmax.f32 %v78, 0.0
    %v95 = vmax.f32 %v79, 0.0
    %v96 = vmax.f32 %v80, 0.0
    %v97 = vmax.f32 %v81, 0.0
    %v98 = vmax.f32 %v82, 0.0
    %v99 = vmax.f32 %v83, 0.0
    %v100 = vmax.f32 %v84, 0.0
    %v101 = vmax.f32 %v85, 0.0
    %v102 = vmax.f32 %v86, 0.0
    %v103 = vmax.f32 %v87, 0.0
    %v104 = vmax.f32 %v88, 0.0
    %v105 = vmax.f32 %v89, 0.0
    %v106 = vpack.c.bf16 %v91, %v90
    %v107 = vpack.c.bf16 %v93, %v92
    %v108 = vpack.c.bf16 %v95, %v94
    %v109 = vpack.c.bf16 %v97, %v96
    %v110 = vpack.c.bf16 %v99, %v98
    %v111 = vpack.c.bf16 %v101, %v100
    %v112 = vpack.c.bf16 %v103, %v102
    %v113 = vpack.c.bf16 %v105, %v104
    %v122 = vunpack.c.l.b16 %v106
    %v123 = vunpack.c.h.b16 %v106
    %v124 = vunpack.c.l.b16 %v107
    %v125 = vunpack.c.h.b16 %v107
    %v126 = vunpack.c.l.b16 %v108
    %v127 = vunpack.c.h.b16 %v108
    %v128 = vunpack.c.l.b16 %v109
    %v129 = vunpack.c.h.b16 %v109
    %v130 = vunpack.c.l.b16 %v110
    %v131 = vunpack.c.h.b16 %v110
    %v132 = vunpack.c.l.b16 %v111
    %v133 = vunpack.c.h.b16 %v111
    %v134 = vunpack.c.l.b16 %v112
    %v135 = vunpack.c.h.b16 %v112
    %v136 = vunpack.c.l.b16 %v113
    %v137 = vunpack.c.h.b16 %v113
    %v138 = vpack.c.b16 %v122, %v122
    %v139 = vpack.c.b16 %v123, %v123
    %v140 = vpack.c.b16 %v124, %v124
    %v141 = vpack.c.b16 %v125, %v125
    %v142 = vpack.c.b16 %v126, %v126
    %v143 = vpack.c.b16 %v127, %v127
    %v144 = vpack.c.b16 %v128, %v128
    %v145 = vpack.c.b16 %v129, %v129
    %v146 = vpack.c.b16 %v130, %v130
    %v147 = vpack.c.b16 %v131, %v131
    %v148 = vpack.c.b16 %v132, %v132
    %v149 = vpack.c.b16 %v133, %v133
    %v150 = vpack.c.b16 %v134, %v134
    %v151 = vpack.c.b16 %v135, %v135
    %v152 = vpack.c.b16 %v136, %v136
    %v153 = vpack.c.b16 %v137, %v137
    %170 = vst [vmem:[%s3] sm:$0xf] %v138
    %171 = vst [vmem:[%s3 + $0x4] sm:$0xf] %v139
    %172 = vst [vmem:[%s3 + $0x8] sm:$0xf] %v140
    %173 = vst [vmem:[%s3 + $0xc] sm:$0xf] %v141
    %174 = vst [vmem:[%s3 + $0x10] sm:$0xf] %v142
    %175 = vst [vmem:[%s3 + $0x14] sm:$0xf] %v143
    %176 = vst [vmem:[%s3 + $0x18] sm:$0xf] %v144
    %177 = vst [vmem:[%s3 + $0x1c] sm:$0xf] %v145
    %178 = vst [vmem:[%s3 + $0x20] sm:$0xf] %v146
    %179 = vst [vmem:[%s3 + $0x24] sm:$0xf] %v147
    %180 = vst [vmem:[%s3 + $0x28] sm:$0xf] %v148
    %181 = vst [vmem:[%s3 + $0x2c] sm:$0xf] %v149
    %182 = vst [vmem:[%s3 + $0x30] sm:$0xf] %v150
    %183 = vst [vmem:[%s3 + $0x34] sm:$0xf] %v151
    %184 = vst [vmem:[%s3 + $0x38] sm:$0xf] %v152
    %185 = vst [vmem:[%s3 + $0x3c] sm:$0xf] %v153
    // Predicated region
    $region18: #{down_forward.6} parent=1 // pred_check
      _
    $region19: #{down_forward.6} parent=1 // pred_check_branch
      %187 = sbr.rel (0) target = $region21
    $region20: #{down_forward.6} parent=1 // pred_region
      _
    $region21: #{down_forward.6} parent=1 // pred_fallthru
      _
    // Predicated region
    $region22: #{down_forward.6} parent=1 // pred_check
      _
    $region23: #{down_forward.6} parent=1 // pred_check_branch
      %189 = sbr.rel (0) target = $region25
    $region24: #{down_forward.6} parent=1 // pred_region
      _
    $region25: #{down_forward.6} parent=1 // pred_fallthru
      _
    %190 = vsyncpa [#allocation3], 1

// kernel: down_forward.5
$region0: #{down_forward.5}
  #allocation0 [shape = 'u32[]', space=smem, size = 0x4, offset = 0x4, fixed_abs, tag = 'smem constant byte address 0x4 - core index']
  #allocation1 [shape = 'u32[144,128]{1,0:T(1,128)}', space=vmem, size = 0x12000, scoped, tag = 'internal scratch']
  %s0 = inlined_call_operand.hbm [shape: bf16[128,36], index: 0, kind: input, shape index: {}]
  %s1 = inlined_call_operand.hbm [shape: bf16[36,128], index: 1, kind: input, shape index: {}]
  %s2 = inlined_call_operand.hbm [shape: f32[128,128], index: 2, kind: output, shape index: {0}]
  %s3 = inlined_call_operand.hbm [shape: f32[1,2,128], index: 3, kind: output, shape index: {1}]
  %4 = xla_tuple %s2, %s3
  %s5 = sld [smem:[#allocation0]]
  $region34: #{down_forward.5} parent=0
    _
  %s7 = ssub.s32 1, %s5
  %s8 = scalar_select 0, %s7, %s5
  $region1: #{down_forward.5} parent=0
    #allocation2 [shape = 'u8[32768]{0}', space=vmem, size = 0x8000, scoped, tag = 'input window, operand 0, single buffered']
    #allocation3 [shape = 's32[1]{0}', space=sflag, size = 0x4, scoped, tag = 'scoped memory for down_forward.5']
    #allocation4 [shape = 's32[1]{0}', space=sflag, size = 0x4, scoped, tag = 'scoped memory for down_forward.5']
    #allocation5 [shape = 'u8[10240]{0}', space=vmem, size = 0x2800, scoped, tag = 'input window, operand 1, single buffered']
    #allocation6 [shape = 's32[1]{0}', space=sflag, size = 0x4, scoped, tag = 'scoped memory for down_forward.5']
    #allocation7 [shape = 'u8[65536]{0}', space=vmem, size = 0x10000, scoped, tag = 'output window, operand 0, single buffered']
    #allocation8 [shape = 'u8[1024]{0}', space=vmem, size = 0x400, scoped, tag = 'output window, operand 1, single buffered']
    #allocation9 [shape = 's32[1]{0}', space=sflag, size = 0x4, scoped, tag = 'scoped memory for down_forward.5']
    %9 = vsyncpa [#allocation3], 0
    %10 = vsyncpa [#allocation6], 0
    %11 = vsyncpa [#allocation4], 0
    %12 = vsyncpa [#allocation9], 0
    // Predicated region
    $region2: #{down_forward.5} parent=1 // pred_check
      _
    $region3: #{down_forward.5} parent=1 // pred_check_branch
      %14 = sbr.rel (0) target = $region5
    $region4: #{down_forward.5} parent=1 // pred_region
      %s16 = ssub.s32 1024, 1024
      %17 = vsyncadd [#allocation3], %s16
      %s18 = sshll.u32 [#allocation2], 4
      %s19 = int_to_ptr.vmem [resolvable:$true] %s18
      %24 = dma.hbm_to_vmem [thread:$0]  %s0, 1024, %s19, [#allocation3], 64, 64, 4
    $region5: #{down_forward.5} parent=1 // pred_fallthru
      _
    // Predicated region
    $region6: #{down_forward.5} parent=1 // pred_check
      _
    $region7: #{down_forward.5} parent=1 // pred_check_branch
      %26 = sbr.rel (0) target = $region9
    $region8: #{down_forward.5} parent=1 // pred_region
      %s28 = ssub.s32 320, 320
      %29 = vsyncadd [#allocation6], %s28
      %s30 = sshll.u32 [#allocation5], 4
      %s31 = int_to_ptr.vmem [resolvable:$true] %s30
      %36 = dma.hbm_to_vmem [thread:$0]  %s1, 320, %s31, [#allocation6], 64, 64, 4
    $region9: #{down_forward.5} parent=1 // pred_fallthru
      _
    // Predicated region
    $region10: #{down_forward.5} parent=1 // pred_check
      _
    $region11: #{down_forward.5} parent=1 // pred_check_branch
      %38 = sbr.rel (0) target = $region13
    $region12: #{down_forward.5} parent=1 // pred_region
      %39 = dma.done [#allocation3], 1024
    $region13: #{down_forward.5} parent=1 // pred_fallthru
      _
    // Predicated region
    $region14: #{down_forward.5} parent=1 // pred_check
      _
    $region15: #{down_forward.5} parent=1 // pred_check_branch
      %41 = sbr.rel (0) target = $region17
    $region16: #{down_forward.5} parent=1 // pred_region
      %42 = dma.done [#allocation6], 320
    $region17: #{down_forward.5} parent=1 // pred_fallthru
      _
    %v44 = vld [vmem:[#allocation2] sm:$0xf]
    %v45 = vld [vmem:[#allocation2 + $0x4] sm:$0xf]
    %v46 = vld [vmem:[#allocation2 + $0x8] sm:$0xf]
    %v47 = vld [vmem:[#allocation2 + $0xc] sm:$0xf]
    %v48 = vld [vmem:[#allocation2 + $0x10] sm:$0xf]
    %v49 = vld [vmem:[#allocation2 + $0x14] sm:$0xf]
    %v50 = vld [vmem:[#allocation2 + $0x18] sm:$0xf]
    %v51 = vld [vmem:[#allocation2 + $0x1c] sm:$0xf]
    %v52 = vld [vmem:[#allocation2 + $0x20] sm:$0xf]
    %v53 = vld [vmem:[#allocation2 + $0x24] sm:$0xf]
    %v54 = vld [vmem:[#allocation2 + $0x28] sm:$0xf]
    %v55 = vld [vmem:[#allocation2 + $0x2c] sm:$0xf]
    %v56 = vld [vmem:[#allocation2 + $0x30] sm:$0xf]
    %v57 = vld [vmem:[#allocation2 + $0x34] sm:$0xf]
    %v58 = vld [vmem:[#allocation2 + $0x38] sm:$0xf]
    %v59 = vld [vmem:[#allocation2 + $0x3c] sm:$0xf]
    %v60 = vld [vmem:[#allocation5] sm:$0xf]
    %v61 = vld [vmem:[#allocation5 + $0x4] sm:$0xf]
    %v62 = vld [vmem:[#allocation5 + $0x8] sm:$0xf]
    %v63 = vld [vmem:[#allocation5 + $0xc] sm:$0xf]
    %v64 = vld [vmem:[#allocation5 + $0x10] sm:$0x3]
    %v81 = vunpack.c.l.b16 %v44
    %v82 = vunpack.c.l.b16 %v45
    %v83 = vunpack.c.l.b16 %v46
    %v84 = vunpack.c.l.b16 %v47
    %v85 = vunpack.c.l.b16 %v48
    %v86 = vunpack.c.l.b16 %v49
    %v87 = vunpack.c.l.b16 %v50
    %v88 = vunpack.c.l.b16 %v51
    %v89 = vunpack.c.l.b16 %v52
    %v90 = vunpack.c.l.b16 %v53
    %v91 = vunpack.c.l.b16 %v54
    %v92 = vunpack.c.l.b16 %v55
    %v93 = vunpack.c.l.b16 %v56
    %v94 = vunpack.c.l.b16 %v57
    %v95 = vunpack.c.l.b16 %v58
    %v96 = vunpack.c.l.b16 %v59
    %v97 = vpack.c.b16 %v82, %v81
    %v98 = vpack.c.b16 %v84, %v83
    %v99 = vpack.c.b16 %v86, %v85
    %v100 = vpack.c.b16 %v88, %v87
    %v101 = vpack.c.b16 %v90, %v89
    %v102 = vpack.c.b16 %v92, %v91
    %v103 = vpack.c.b16 %v94, %v93
    %v104 = vpack.c.b16 %v96, %v95
    %v110 = vunpack.c.l.b16 %v60
    %v111 = vunpack.c.l.b16 %v61
    %v112 = vunpack.c.l.b16 %v62
    %v113 = vunpack.c.l.b16 %v63
    %v114 = vunpack.c.l.b16 %v64
    %v115 = vpack.c.b16 %v111, %v110
    %v116 = vpack.c.b16 %v113, %v112
    %v117 = vpack.c.b16 %v114, %v114
    %vm120 = vcmask 293888
    %v122 = vsel %vm120, %v97, 0
    %v125 = vsel %vm120, %v98, 0
    %v128 = vsel %vm120, %v99, 0
    %v131 = vsel %vm120, %v100, 0
    %v134 = vsel %vm120, %v101, 0
    %v137 = vsel %vm120, %v102, 0
    %v140 = vsel %vm120, %v103, 0
    %v143 = vsel %vm120, %v104, 0
    %vm145 = vcmask 1041408
    %v147 = vsel %vm145, %v117, 0
    %149 = vmatprep.subr.bf16.mxu0 0
    %150 = vmatpush1.bf16.msra.mxu0 %v115
    %151 = vmatprep.subr.bf16.mxu0 0
    %152 = vmatpush1.bf16.msra.mxu0 %v116
    %153 = vmatprep.subr.bf16.mxu0 0
    %154 = vmatpush1.bf16.msra.mxu0 %v147
    %155 = vmatprep.subr.bf16.mxu0 0
    %156 = vmatpush1.bf16.msra.mxu0 0
    %157 = vmatprep.subr.bf16.mxu0 0
    %158 = vmatpush1.bf16.msra.mxu0 0
    %159 = vmatprep.subr.bf16.mxu0 0
    %160 = vmatpush1.bf16.msra.mxu0 0
    %161 = vmatprep.subr.bf16.mxu0 0
    %162 = vmatpush1.bf16.msra.mxu0 0
    %163 = vmatprep.subr.bf16.mxu0 0
    %164 = vmatpush1.bf16.msra.mxu0 0
    %165 = vmatprep.subr.bf16.mxu0 0
    %166 = vmatpush1.bf16.msra.mxu0 0
    %167 = vmatprep.subr.bf16.mxu0 0
    %168 = vmatpush1.bf16.msra.mxu0 0
    %169 = vmatprep.subr.bf16.mxu0 0
    %170 = vmatpush1.bf16.msra.mxu0 0
    %171 = vmatprep.subr.bf16.mxu0 0
    %172 = vmatpush1.bf16.msra.mxu0 0
    %173 = vmatprep.subr.bf16.mxu0 0
    %174 = vmatpush1.bf16.msra.mxu0 0
    %175 = vmatprep.subr.bf16.mxu0 0
    %176 = vmatpush1.bf16.msra.mxu0 0
    %177 = vmatprep.subr.bf16.mxu0 0
    %178 = vmatpush1.bf16.msra.mxu0 0
    %179 = vmatprep.subr.bf16.mxu0 0
    %180 = vmatpush1.bf16.msra.mxu0 0
    %181 = vmatprep.mubr.bf16.mxu0 0
    %182 = vmatmul.mubr.bf16.gmra.mrb[0].mxu0 %v122
    %v183 = vpop.f32.mrb[0].mxu0
    %v184 = vadd.f32 0.0, %v183
    %v185 = vpop.f32.mrb[0].mxu0
    %v186 = vpop.f32.mrb[0].mxu0
    %v187 = vadd.f32 0.0, %v186
    %v188 = vpop.f32.mrb[0].mxu0
    %189 = vmatprep.mubr.bf16.mxu0 0
    %190 = vmatmul.mubr.bf16.gmra.mrb[0].mxu0 %v125
    %v191 = vpop.f32.mrb[0].mxu0
    %v192 = vadd.f32 0.0, %v191
    %v193 = vpop.f32.mrb[0].mxu0
    %v194 = vpop.f32.mrb[0].mxu0
    %v195 = vadd.f32 0.0, %v194
    %v196 = vpop.f32.mrb[0].mxu0
    %197 = vmatprep.mubr.bf16.mxu0 0
    %198 = vmatmul.mubr.bf16.gmra.mrb[0].mxu0 %v128
    %v199 = vpop.f32.mrb[0].mxu0
    %v200 = vadd.f32 0.0, %v199
    %v201 = vpop.f32.mrb[0].mxu0
    %v202 = vpop.f32.mrb[0].mxu0
    %v203 = vadd.f32 0.0, %v202
    %v204 = vpop.f32.mrb[0].mxu0
    %205 = vmatprep.mubr.bf16.mxu0 0
    %206 = vmatmul.mubr.bf16.gmra.mrb[0].mxu0 %v131
    %v207 = vpop.f32.mrb[0].mxu0
    %v208 = vadd.f32 0.0, %v207
    %v209 = vpop.f32.mrb[0].mxu0
    %v210 = vpop.f32.mrb[0].mxu0
    %v211 = vadd.f32 0.0, %v210
    %v212 = vpop.f32.mrb[0].mxu0
    %213 = vmatprep.mubr.bf16.mxu0 0
    %214 = vmatmul.mubr.bf16.gmra.mrb[0].mxu0 %v134
    %v215 = vpop.f32.mrb[0].mxu0
    %v216 = vadd.f32 0.0, %v215
    %v217 = vpop.f32.mrb[0].mxu0
    %v218 = vpop.f32.mrb[0].mxu0
    %v219 = vadd.f32 0.0, %v218
    %v220 = vpop.f32.mrb[0].mxu0
    %221 = vmatprep.mubr.bf16.mxu0 0
    %222 = vmatmul.mubr.bf16.gmra.mrb[0].mxu0 %v137
    %v223 = vpop.f32.mrb[0].mxu0
    %v224 = vadd.f32 0.0, %v223
    %v225 = vpop.f32.mrb[0].mxu0
    %v226 = vpop.f32.mrb[0].mxu0
    %v227 = vadd.f32 0.0, %v226
    %v228 = vpop.f32.mrb[0].mxu0
    %229 = vmatprep.mubr.bf16.mxu0 0
    %230 = vmatmul.mubr.bf16.gmra.mrb[0].mxu0 %v140
    %v231 = vpop.f32.mrb[0].mxu0
    %v232 = vadd.f32 0.0, %v231
    %v233 = vpop.f32.mrb[0].mxu0
    %v234 = vpop.f32.mrb[0].mxu0
    %v235 = vadd.f32 0.0, %v234
    %v236 = vpop.f32.mrb[0].mxu0
    %237 = vmatprep.mubr.bf16.mxu0 0
    %238 = vmatmul.mubr.bf16.gmra.mrb[0].mxu0 %v143
    %v239 = vpop.f32.mrb[0].mxu0
    %v240 = vadd.f32 0.0, %v239
    %v241 = vpop.f32.mrb[0].mxu0
    %v242 = vpop.f32.mrb[0].mxu0
    %v243 = vadd.f32 0.0, %v242
    %v244 = vpop.f32.mrb[0].mxu0
    %245 = vdwg.mxu0
    %246 = vst [vmem:[#allocation7] sm:$0xff] %v184
    %247 = vst [vmem:[#allocation7 + $0x8] sm:$0xff] %v187
    %248 = vst [vmem:[#allocation7 + $0x10] sm:$0xff] %v192
    %249 = vst [vmem:[#allocation7 + $0x18] sm:$0xff] %v195
    %250 = vst [vmem:[#allocation7 + $0x20] sm:$0xff] %v200
    %251 = vst [vmem:[#allocation7 + $0x28] sm:$0xff] %v203
    %252 = vst [vmem:[#allocation7 + $0x30] sm:$0xff] %v208
    %253 = vst [vmem:[#allocation7 + $0x38] sm:$0xff] %v211
    %254 = vst [vmem:[#allocation7 + $0x40] sm:$0xff] %v216
    %255 = vst [vmem:[#allocation7 + $0x48] sm:$0xff] %v219
    %256 = vst [vmem:[#allocation7 + $0x50] sm:$0xff] %v224
    %257 = vst [vmem:[#allocation7 + $0x58] sm:$0xff] %v227
    %258 = vst [vmem:[#allocation7 + $0x60] sm:$0xff] %v232
    %259 = vst [vmem:[#allocation7 + $0x68] sm:$0xff] %v235
    %260 = vst [vmem:[#allocation7 + $0x70] sm:$0xff] %v240
    %261 = vst [vmem:[#allocation7 + $0x78] sm:$0xff] %v243
    %v262 = vadd.f32 %v184, %v187
    %v263 = vadd.f32 %v262, %v192
    %v264 = vadd.f32 %v263, %v195
    %v265 = vadd.f32 %v264, %v200
    %v266 = vadd.f32 %v265, %v203
    %v267 = vadd.f32 %v266, %v208
    %v268 = vadd.f32 %v267, %v211
    %v269 = vadd.f32 %v268, %v216
    %v270 = vadd.f32 %v269, %v219
    %v271 = vadd.f32 %v270, %v224
    %v272 = vadd.f32 %v271, %v227
    %v273 = vadd.f32 %v272, %v232
    %v274 = vadd.f32 %v273, %v235
    %v275 = vadd.f32 %v274, %v240
    %v276 = vadd.f32 %v275, %v243
    %v277 = vrot.slane %v276, 4
    %v278 = vadd.f32 %v276, %v277
    %v279 = vrot.slane %v278, 2
    %v280 = vadd.f32 %v278, %v279
    %v281 = vrot.slane %v280, 1
    %v282 = vadd.f32 %v280, %v281
    %v283 = vmul.f32 %v184, %v184
    %v284 = vmul.f32 %v187, %v187
    %v285 = vmul.f32 %v192, %v192
    %v286 = vmul.f32 %v195, %v195
    %v287 = vmul.f32 %v200, %v200
    %v288 = vmul.f32 %v203, %v203
    %v289 = vmul.f32 %v208, %v208
    %v290 = vmul.f32 %v211, %v211
    %v291 = vmul.f32 %v216, %v216
    %v292 = vmul.f32 %v219, %v219
    %v293 = vmul.f32 %v224, %v224
    %v294 = vmul.f32 %v227, %v227
    %v295 = vmul.f32 %v232, %v232
    %v296 = vmul.f32 %v235, %v235
    %v297 = vmul.f32 %v240, %v240
    %v298 = vmul.f32 %v243, %v243
    %v299 = vadd.f32 %v283, %v284
    %v300 = vadd.f32 %v299, %v285
    %v301 = vadd.f32 %v300, %v286
    %v302 = vadd.f32 %v301, %v287
    %v303 = vadd.f32 %v302, %v288
    %v304 = vadd.f32 %v303, %v289
    %v305 = vadd.f32 %v304, %v290
    %v306 = vadd.f32 %v305, %v291
    %v307 = vadd.f32 %v306, %v292
    %v308 = vadd.f32 %v307, %v293
    %v309 = vadd.f32 %v308, %v294
    %v310 = vadd.f32 %v309, %v295
    %v311 = vadd.f32 %v310, %v296
    %v312 = vadd.f32 %v311, %v297
    %v313 = vadd.f32 %v312, %v298
    %v314 = vrot.slane %v313, 4
    %v315 = vadd.f32 %v313, %v314
    %v316 = vrot.slane %v315, 2
    %v317 = vadd.f32 %v315, %v316
    %v318 = vrot.slane %v317, 1
    %v319 = vadd.f32 %v317, %v318
    %vm320 = vcmask 1040384
    %v321 = vsel %vm320, %v282, %v319
    %322 = vst [vmem:[#allocation8] sm:$0x3] %v321
    // Predicated region
    $region18: #{down_forward.5} parent=1 // pred_check
      _
    $region19: #{down_forward.5} parent=1 // pred_check_branch
      %324 = sbr.rel (0) target = $region21
    $region20: #{down_forward.5} parent=1 // pred_region
      %s326 = ssub.s32 2048, 2048
      %327 = vsyncadd [#allocation4], %s326
      %s328 = sshll.u32 [#allocation7], 4
      %s329 = int_to_ptr.vmem [resolvable:$true] %s328
      %334 = dma.vmem_to_hbm [thread:$0]  %s329, 2048, %s2, [#allocation4], 128, 128, 8
    $region21: #{down_forward.5} parent=1 // pred_fallthru
      _
    // Predicated region
    $region22: #{down_forward.5} parent=1 // pred_check
      _
    $region23: #{down_forward.5} parent=1 // pred_check_branch
      %336 = sbr.rel (0) target = $region25
    $region24: #{down_forward.5} parent=1 // pred_region
      %s338 = ssub.s32 32, 32
      %339 = vsyncadd [#allocation9], %s338
      %s341 = sshll.u32 [#allocation8], 4
      %s342 = int_to_ptr.vmem [resolvable:$true] %s341
      %344 = dma.vmem_to_hbm [thread:$0]  %s342, 32, %s3, [#allocation9]
    $region25: #{down_forward.5} parent=1 // pred_fallthru
      _
    // Predicated region
    $region26: #{down_forward.5} parent=1 // pred_check
      _
    $region27: #{down_forward.5} parent=1 // pred_check_branch
      %346 = sbr.rel (0) target = $region29
    $region28: #{down_forward.5} parent=1 // pred_region
      %347 = dma.done [#allocation4], 2048
    $region29: #{down_forward.5} parent=1 // pred_fallthru
      _
    // Predicated region
    $region30: #{down_forward.5} parent=1 // pred_check
      _
    $region31: #{down_forward.5} parent=1 // pred_check_branch
      %349 = sbr.rel (0) target = $region33
    $region32: #{down_forward.5} parent=1 // pred_region
      %350 = dma.done [#allocation9], 32
    $region33: #{down_forward.5} parent=1 // pred_fallthru
      _
    %351 = vsyncpa [#allocation3], 1
    %352 = vsyncpa [#allocation6], 1
    %353 = vsyncpa [#allocation4], 1
    %354 = vsyncpa [#allocation9], 1

// kernel: down_forward.7
$region0: #{down_forward.7}
  #allocation0 [shape = 'u32[]', space=smem, size = 0x4, offset = 0x4, fixed_abs, tag = 'smem constant byte address 0x4 - core index']
  #allocation1 [shape = 'u32[144,128]{1,0:T(1,128)}', space=vmem, size = 0x12000, scoped, tag = 'internal scratch']
  %s0 = inlined_call_operand.hbm [shape: bf16[128,72], index: 0, kind: input, shape index: {}]
  %s1 = inlined_call_operand.hbm [shape: bf16[72,128], index: 1, kind: input, shape index: {}]
  %s2 = inlined_call_operand.hbm [shape: f32[128,128], index: 2, kind: output, shape index: {0}]
  %s3 = inlined_call_operand.hbm [shape: f32[1,2,128], index: 3, kind: output, shape index: {1}]
  %4 = xla_tuple %s2, %s3
  %s5 = sld [smem:[#allocation0]]
  $region34: #{down_forward.7} parent=0
    _
  %s7 = ssub.s32 1, %s5
  %s8 = scalar_select 0, %s7, %s5
  $region1: #{down_forward.7} parent=0
    #allocation2 [shape = 'u8[32768]{0}', space=vmem, size = 0x8000, scoped, tag = 'input window, operand 0, single buffered']
    #allocation3 [shape = 's32[1]{0}', space=sflag, size = 0x4, scoped, tag = 'scoped memory for down_forward.7']
    #allocation4 [shape = 's32[1]{0}', space=sflag, size = 0x4, scoped, tag = 'scoped memory for down_forward.7']
    #allocation5 [shape = 'u8[18432]{0}', space=vmem, size = 0x4800, scoped, tag = 'input window, operand 1, single buffered']
    #allocation6 [shape = 's32[1]{0}', space=sflag, size = 0x4, scoped, tag = 'scoped memory for down_forward.7']
    #allocation7 [shape = 'u8[65536]{0}', space=vmem, size = 0x10000, scoped, tag = 'output window, operand 0, single buffered']
    #allocation8 [shape = 'u8[1024]{0}', space=vmem, size = 0x400, scoped, tag = 'output window, operand 1, single buffered']
    #allocation9 [shape = 's32[1]{0}', space=sflag, size = 0x4, scoped, tag = 'scoped memory for down_forward.7']
    %9 = vsyncpa [#allocation3], 0
    %10 = vsyncpa [#allocation6], 0
    %11 = vsyncpa [#allocation4], 0
    %12 = vsyncpa [#allocation9], 0
    // Predicated region
    $region2: #{down_forward.7} parent=1 // pred_check
      _
    $region3: #{down_forward.7} parent=1 // pred_check_branch
      %14 = sbr.rel (0) target = $region5
    $region4: #{down_forward.7} parent=1 // pred_region
      %s16 = ssub.s32 1024, 1024
      %17 = vsyncadd [#allocation3], %s16
      %s18 = sshll.u32 [#allocation2], 4
      %s19 = int_to_ptr.vmem [resolvable:$true] %s18
      %24 = dma.hbm_to_vmem [thread:$0]  %s0, 1024, %s19, [#allocation3], 64, 64, 4
    $region5: #{down_forward.7} parent=1 // pred_fallthru
      _
    // Predicated region
    $region6: #{down_forward.7} parent=1 // pred_check
      _
    $region7: #{down_forward.7} parent=1 // pred_check_branch
      %26 = sbr.rel (0) target = $region9
    $region8: #{down_forward.7} parent=1 // pred_region
      %s28 = ssub.s32 576, 576
      %29 = vsyncadd [#allocation6], %s28
      %s30 = sshll.u32 [#allocation5], 4
      %s31 = int_to_ptr.vmem [resolvable:$true] %s30
      %36 = dma.hbm_to_vmem [thread:$0]  %s1, 576, %s31, [#allocation6], 64, 64, 4
    $region9: #{down_forward.7} parent=1 // pred_fallthru
      _
    // Predicated region
    $region10: #{down_forward.7} parent=1 // pred_check
      _
    $region11: #{down_forward.7} parent=1 // pred_check_branch
      %38 = sbr.rel (0) target = $region13
    $region12: #{down_forward.7} parent=1 // pred_region
      %39 = dma.done [#allocation3], 1024
    $region13: #{down_forward.7} parent=1 // pred_fallthru
      _
    // Predicated region
    $region14: #{down_forward.7} parent=1 // pred_check
      _
    $region15: #{down_forward.7} parent=1 // pred_check_branch
      %41 = sbr.rel (0) target = $region17
    $region16: #{down_forward.7} parent=1 // pred_region
      %42 = dma.done [#allocation6], 576
    $region17: #{down_forward.7} parent=1 // pred_fallthru
      _
    %v44 = vld [vmem:[#allocation2] sm:$0xf]
    %v45 = vld [vmem:[#allocation2 + $0x4] sm:$0xf]
    %v46 = vld [vmem:[#allocation2 + $0x8] sm:$0xf]
    %v47 = vld [vmem:[#allocation2 + $0xc] sm:$0xf]
    %v48 = vld [vmem:[#allocation2 + $0x10] sm:$0xf]
    %v49 = vld [vmem:[#allocation2 + $0x14] sm:$0xf]
    %v50 = vld [vmem:[#allocation2 + $0x18] sm:$0xf]
    %v51 = vld [vmem:[#allocation2 + $0x1c] sm:$0xf]
    %v52 = vld [vmem:[#allocation2 + $0x20] sm:$0xf]
    %v53 = vld [vmem:[#allocation2 + $0x24] sm:$0xf]
    %v54 = vld [vmem:[#allocation2 + $0x28] sm:$0xf]
    %v55 = vld [vmem:[#allocation2 + $0x2c] sm:$0xf]
    %v56 = vld [vmem:[#allocation2 + $0x30] sm:$0xf]
    %v57 = vld [vmem:[#allocation2 + $0x34] sm:$0xf]
    %v58 = vld [vmem:[#allocation2 + $0x38] sm:$0xf]
    %v59 = vld [vmem:[#allocation2 + $0x3c] sm:$0xf]
    %v60 = vld [vmem:[#allocation5] sm:$0xf]
    %v61 = vld [vmem:[#allocation5 + $0x4] sm:$0xf]
    %v62 = vld [vmem:[#allocation5 + $0x8] sm:$0xf]
    %v63 = vld [vmem:[#allocation5 + $0xc] sm:$0xf]
    %v64 = vld [vmem:[#allocation5 + $0x10] sm:$0xf]
    %v65 = vld [vmem:[#allocation5 + $0x14] sm:$0xf]
    %v66 = vld [vmem:[#allocation5 + $0x18] sm:$0xf]
    %v67 = vld [vmem:[#allocation5 + $0x1c] sm:$0xf]
    %v68 = vld [vmem:[#allocation5 + $0x20] sm:$0xf]
    %v85 = vunpack.c.l.b16 %v44
    %v86 = vunpack.c.l.b16 %v45
    %v87 = vunpack.c.l.b16 %v46
    %v88 = vunpack.c.l.b16 %v47
    %v89 = vunpack.c.l.b16 %v48
    %v90 = vunpack.c.l.b16 %v49
    %v91 = vunpack.c.l.b16 %v50
    %v92 = vunpack.c.l.b16 %v51
    %v93 = vunpack.c.l.b16 %v52
    %v94 = vunpack.c.l.b16 %v53
    %v95 = vunpack.c.l.b16 %v54
    %v96 = vunpack.c.l.b16 %v55
    %v97 = vunpack.c.l.b16 %v56
    %v98 = vunpack.c.l.b16 %v57
    %v99 = vunpack.c.l.b16 %v58
    %v100 = vunpack.c.l.b16 %v59
    %v101 = vpack.c.b16 %v86, %v85
    %v102 = vpack.c.b16 %v88, %v87
    %v103 = vpack.c.b16 %v90, %v89
    %v104 = vpack.c.b16 %v92, %v91
    %v105 = vpack.c.b16 %v94, %v93
    %v106 = vpack.c.b16 %v96, %v95
    %v107 = vpack.c.b16 %v98, %v97
    %v108 = vpack.c.b16 %v100, %v99
    %v118 = vunpack.c.l.b16 %v60
    %v119 = vunpack.c.l.b16 %v61
    %v120 = vunpack.c.l.b16 %v62
    %v121 = vunpack.c.l.b16 %v63
    %v122 = vunpack.c.l.b16 %v64
    %v123 = vunpack.c.l.b16 %v65
    %v124 = vunpack.c.l.b16 %v66
    %v125 = vunpack.c.l.b16 %v67
    %v126 = vunpack.c.l.b16 %v68
    %v127 = vpack.c.b16 %v119, %v118
    %v128 = vpack.c.b16 %v121, %v120
    %v129 = vpack.c.b16 %v123, %v122
    %v130 = vpack.c.b16 %v125, %v124
    %v131 = vpack.c.b16 %v126, %v126
    %vm136 = vcmask 588800
    %v138 = vsel %vm136, %v101, 0
    %v141 = vsel %vm136, %v102, 0
    %v144 = vsel %vm136, %v103, 0
    %v147 = vsel %vm136, %v104, 0
    %v150 = vsel %vm136, %v105, 0
    %v153 = vsel %vm136, %v106, 0
    %v156 = vsel %vm136, %v107, 0
    %v159 = vsel %vm136, %v108, 0
    %vm161 = vcmask 1043456
    %v163 = vsel %vm161, %v131, 0
    %165 = vmatprep.subr.bf16.mxu0 0
    %166 = vmatpush1.bf16.msra.mxu0 %v127
    %167 = vmatprep.subr.bf16.mxu0 0
    %168 = vmatpush1.bf16.msra.mxu0 %v128
    %169 = vmatprep.subr.bf16.mxu0 0
    %170 = vmatpush1.bf16.msra.mxu0 %v129
    %171 = vmatprep.subr.bf16.mxu0 0
    %172 = vmatpush1.bf16.msra.mxu0 %v130
    %173 = vmatprep.subr.bf16.mxu0 0
    %174 = vmatpush1.bf16.msra.mxu0 %v163
    %175 = vmatprep.subr.bf16.mxu0 0
    %176 = vmatpush1.bf16.msra.mxu0 0
    %177 = vmatprep.subr.bf16.mxu0 0
    %178 = vmatpush1.bf16.msra.mxu0 0
    %179 = vmatprep.subr.bf16.mxu0 0
    %180 = vmatpush1.bf16.msra.mxu0 0
    %181 = vmatprep.subr.bf16.mxu0 0
    %182 = vmatpush1.bf16.msra.mxu0 0
    %183 = vmatprep.subr.bf16.mxu0 0
    %184 = vmatpush1.bf16.msra.mxu0 0
    %185 = vmatprep.subr.bf16.mxu0 0
    %186 = vmatpush1.bf16.msra.mxu0 0
    %187 = vmatprep.subr.bf16.mxu0 0
    %188 = vmatpush1.bf16.msra.mxu0 0
    %189 = vmatprep.subr.bf16.mxu0 0
    %190 = vmatpush1.bf16.msra.mxu0 0
    %191 = vmatprep.subr.bf16.mxu0 0
    %192 = vmatpush1.bf16.msra.mxu0 0
    %193 = vmatprep.subr.bf16.mxu0 0
    %194 = vmatpush1.bf16.msra.mxu0 0
    %195 = vmatprep.subr.bf16.mxu0 0
    %196 = vmatpush1.bf16.msra.mxu0 0
    %197 = vmatprep.mubr.bf16.mxu0 0
    %198 = vmatmul.mubr.bf16.gmra.mrb[0].mxu0 %v138
    %v199 = vpop.f32.mrb[0].mxu0
    %v200 = vadd.f32 0.0, %v199
    %v201 = vpop.f32.mrb[0].mxu0
    %v202 = vpop.f32.mrb[0].mxu0
    %v203 = vadd.f32 0.0, %v202
    %v204 = vpop.f32.mrb[0].mxu0
    %205 = vmatprep.mubr.bf16.mxu0 0
    %206 = vmatmul.mubr.bf16.gmra.mrb[0].mxu0 %v141
    %v207 = vpop.f32.mrb[0].mxu0
    %v208 = vadd.f32 0.0, %v207
    %v209 = vpop.f32.mrb[0].mxu0
    %v210 = vpop.f32.mrb[0].mxu0
    %v211 = vadd.f32 0.0, %v210
    %v212 = vpop.f32.mrb[0].mxu0
    %213 = vmatprep.mubr.bf16.mxu0 0
    %214 = vmatmul.mubr.bf16.gmra.mrb[0].mxu0 %v144
    %v215 = vpop.f32.mrb[0].mxu0
    %v216 = vadd.f32 0.0, %v215
    %v217 = vpop.f32.mrb[0].mxu0
    %v218 = vpop.f32.mrb[0].mxu0
    %v219 = vadd.f32 0.0, %v218
    %v220 = vpop.f32.mrb[0].mxu0
    %221 = vmatprep.mubr.bf16.mxu0 0
    %222 = vmatmul.mubr.bf16.gmra.mrb[0].mxu0 %v147
    %v223 = vpop.f32.mrb[0].mxu0
    %v224 = vadd.f32 0.0, %v223
    %v225 = vpop.f32.mrb[0].mxu0
    %v226 = vpop.f32.mrb[0].mxu0
    %v227 = vadd.f32 0.0, %v226
    %v228 = vpop.f32.mrb[0].mxu0
    %229 = vmatprep.mubr.bf16.mxu0 0
    %230 = vmatmul.mubr.bf16.gmra.mrb[0].mxu0 %v150
    %v231 = vpop.f32.mrb[0].mxu0
    %v232 = vadd.f32 0.0, %v231
    %v233 = vpop.f32.mrb[0].mxu0
    %v234 = vpop.f32.mrb[0].mxu0
    %v235 = vadd.f32 0.0, %v234
    %v236 = vpop.f32.mrb[0].mxu0
    %237 = vmatprep.mubr.bf16.mxu0 0
    %238 = vmatmul.mubr.bf16.gmra.mrb[0].mxu0 %v153
    %v239 = vpop.f32.mrb[0].mxu0
    %v240 = vadd.f32 0.0, %v239
    %v241 = vpop.f32.mrb[0].mxu0
    %v242 = vpop.f32.mrb[0].mxu0
    %v243 = vadd.f32 0.0, %v242
    %v244 = vpop.f32.mrb[0].mxu0
    %245 = vmatprep.mubr.bf16.mxu0 0
    %246 = vmatmul.mubr.bf16.gmra.mrb[0].mxu0 %v156
    %v247 = vpop.f32.mrb[0].mxu0
    %v248 = vadd.f32 0.0, %v247
    %v249 = vpop.f32.mrb[0].mxu0
    %v250 = vpop.f32.mrb[0].mxu0
    %v251 = vadd.f32 0.0, %v250
    %v252 = vpop.f32.mrb[0].mxu0
    %253 = vmatprep.mubr.bf16.mxu0 0
    %254 = vmatmul.mubr.bf16.gmra.mrb[0].mxu0 %v159
    %v255 = vpop.f32.mrb[0].mxu0
    %v256 = vadd.f32 0.0, %v255
    %v257 = vpop.f32.mrb[0].mxu0
    %v258 = vpop.f32.mrb[0].mxu0
    %v259 = vadd.f32 0.0, %v258
    %v260 = vpop.f32.mrb[0].mxu0
    %261 = vdwg.mxu0
    %262 = vst [vmem:[#allocation7] sm:$0xff] %v200
    %263 = vst [vmem:[#allocation7 + $0x8] sm:$0xff] %v203
    %264 = vst [vmem:[#allocation7 + $0x10] sm:$0xff] %v208
    %265 = vst [vmem:[#allocation7 + $0x18] sm:$0xff] %v211
    %266 = vst [vmem:[#allocation7 + $0x20] sm:$0xff] %v216
    %267 = vst [vmem:[#allocation7 + $0x28] sm:$0xff] %v219
    %268 = vst [vmem:[#allocation7 + $0x30] sm:$0xff] %v224
    %269 = vst [vmem:[#allocation7 + $0x38] sm:$0xff] %v227
    %270 = vst [vmem:[#allocation7 + $0x40] sm:$0xff] %v232
    %271 = vst [vmem:[#allocation7 + $0x48] sm:$0xff] %v235
    %272 = vst [vmem:[#allocation7 + $0x50] sm:$0xff] %v240
    %273 = vst [vmem:[#allocation7 + $0x58] sm:$0xff] %v243
    %274 = vst [vmem:[#allocation7 + $0x60] sm:$0xff] %v248
    %275 = vst [vmem:[#allocation7 + $0x68] sm:$0xff] %v251
    %276 = vst [vmem:[#allocation7 + $0x70] sm:$0xff] %v256
    %277 = vst [vmem:[#allocation7 + $0x78] sm:$0xff] %v259
    %v278 = vadd.f32 %v200, %v203
    %v279 = vadd.f32 %v278, %v208
    %v280 = vadd.f32 %v279, %v211
    %v281 = vadd.f32 %v280, %v216
    %v282 = vadd.f32 %v281, %v219
    %v283 = vadd.f32 %v282, %v224
    %v284 = vadd.f32 %v283, %v227
    %v285 = vadd.f32 %v284, %v232
    %v286 = vadd.f32 %v285, %v235
    %v287 = vadd.f32 %v286, %v240
    %v288 = vadd.f32 %v287, %v243
    %v289 = vadd.f32 %v288, %v248
    %v290 = vadd.f32 %v289, %v251
    %v291 = vadd.f32 %v290, %v256
    %v292 = vadd.f32 %v291, %v259
    %v293 = vrot.slane %v292, 4
    %v294 = vadd.f32 %v292, %v293
    %v295 = vrot.slane %v294, 2
    %v296 = vadd.f32 %v294, %v295
    %v297 = vrot.slane %v296, 1
    %v298 = vadd.f32 %v296, %v297
    %v299 = vmul.f32 %v200, %v200
    %v300 = vmul.f32 %v203, %v203
    %v301 = vmul.f32 %v208, %v208
    %v302 = vmul.f32 %v211, %v211
    %v303 = vmul.f32 %v216, %v216
    %v304 = vmul.f32 %v219, %v219
    %v305 = vmul.f32 %v224, %v224
    %v306 = vmul.f32 %v227, %v227
    %v307 = vmul.f32 %v232, %v232
    %v308 = vmul.f32 %v235, %v235
    %v309 = vmul.f32 %v240, %v240
    %v310 = vmul.f32 %v243, %v243
    %v311 = vmul.f32 %v248, %v248
    %v312 = vmul.f32 %v251, %v251
    %v313 = vmul.f32 %v256, %v256
    %v314 = vmul.f32 %v259, %v259
    %v315 = vadd.f32 %v299, %v300
    %v316 = vadd.f32 %v315, %v301
    %v317 = vadd.f32 %v316, %v302
    %v318 = vadd.f32 %v317, %v303
    %v319 = vadd.f32 %v318, %v304
    %v320 = vadd.f32 %v319, %v305
    %v321 = vadd.f32 %v320, %v306
    %v322 = vadd.f32 %v321, %v307
    %v323 = vadd.f32 %v322, %v308
    %v324 = vadd.f32 %v323, %v309
    %v325 = vadd.f32 %v324, %v310
    %v326 = vadd.f32 %v325, %v311
    %v327 = vadd.f32 %v326, %v312
    %v328 = vadd.f32 %v327, %v313
    %v329 = vadd.f32 %v328, %v314
    %v330 = vrot.slane %v329, 4
    %v331 = vadd.f32 %v329, %v330
    %v332 = vrot.slane %v331, 2
    %v333 = vadd.f32 %v331, %v332
    %v334 = vrot.slane %v333, 1
    %v335 = vadd.f32 %v333, %v334
    %vm336 = vcmask 1040384
    %v337 = vsel %vm336, %v298, %v335
    %338 = vst [vmem:[#allocation8] sm:$0x3] %v337
    // Predicated region
    $region18: #{down_forward.7} parent=1 // pred_check
      _
    $region19: #{down_forward.7} parent=1 // pred_check_branch
      %340 = sbr.rel (0) target = $region21
    $region20: #{down_forward.7} parent=1 // pred_region
      %s342 = ssub.s32 2048, 2048
      %343 = vsyncadd [#allocation4], %s342
      %s344 = sshll.u32 [#allocation7], 4
      %s345 = int_to_ptr.vmem [resolvable:$true] %s344
      %350 = dma.vmem_to_hbm [thread:$0]  %s345, 2048, %s2, [#allocation4], 128, 128, 8
    $region21: #{down_forward.7} parent=1 // pred_fallthru
      _
    // Predicated region
    $region22: #{down_forward.7} parent=1 // pred_check
      _
    $region23: #{down_forward.7} parent=1 // pred_check_branch
      %352 = sbr.rel (0) target = $region25
    $region24: #{down_forward.7} parent=1 // pred_region
      %s354 = ssub.s32 32, 32
      %355 = vsyncadd [#allocation9], %s354
      %s357 = sshll.u32 [#allocation8], 4
      %s358 = int_to_ptr.vmem [resolvable:$true] %s357
      %360 = dma.vmem_to_hbm [thread:$0]  %s358, 32, %s3, [#allocation9]
    $region25: #{down_forward.7} parent=1 // pred_fallthru
      _
    // Predicated region
    $region26: #{down_forward.7} parent=1 // pred_check
      _
    $region27: #{down_forward.7} parent=1 // pred_check_branch
      %362 = sbr.rel (0) target = $region29
    $region28: #{down_forward.7} parent=1 // pred_region
      %363 = dma.done [#allocation4], 2048
    $region29: #{down_forward.7} parent=1 // pred_fallthru
      _
    // Predicated region
    $region30: #{down_forward.7} parent=1 // pred_check
      _
    $region31: #{down_forward.7} parent=1 // pred_check_branch
      %365 = sbr.rel (0) target = $region33
    $region32: #{down_forward.7} parent=1 // pred_region
      %366 = dma.done [#allocation9], 32
    $region33: #{down_forward.7} parent=1 // pred_fallthru
      _
    %367 = vsyncpa [#allocation3], 1
    %368 = vsyncpa [#allocation6], 1
    %369 = vsyncpa [#allocation4], 1
    %370 = vsyncpa [#allocation9], 1

// kernel: down_forward.9
$region0: #{down_forward.9}
  #allocation0 [shape = 'u32[]', space=smem, size = 0x4, offset = 0x4, fixed_abs, tag = 'smem constant byte address 0x4 - core index']
  #allocation1 [shape = 'u32[144,128]{1,0:T(1,128)}', space=vmem, size = 0x12000, scoped, tag = 'internal scratch']
  %s0 = inlined_call_operand.vmem [shape: f32[128,128], index: 0, kind: input, shape index: {}]
  %s1 = inlined_call_operand.vmem [shape: f32[1,128], index: 1, kind: input, shape index: {}]
  %s2 = inlined_call_operand.vmem [shape: f32[1,128], index: 2, kind: input, shape index: {}]
  %s3 = inlined_call_operand.vmem [shape: f32[1,128], index: 3, kind: input, shape index: {}]
  %s4 = inlined_call_operand.vmem [shape: f32[1,128], index: 4, kind: input, shape index: {}]
  %s5 = inlined_call_operand.vmem [shape: f32[128,128], index: 5, kind: output, shape index: {}]
  %s6 = sld [smem:[#allocation0]]
  $region30: #{down_forward.9} parent=0
    _
  %s8 = ssub.s32 1, %s6
  %s9 = scalar_select 0, %s8, %s6
  // Predicated region
  $region2: #{down_forward.9} parent=0 // pred_check
    _
  $region3: #{down_forward.9} parent=0 // pred_check_branch
    %11 = sbr.rel (0) target = $region5
  $region4: #{down_forward.9} parent=0 // pred_region
    _
  $region5: #{down_forward.9} parent=0 // pred_fallthru
    _
  // Predicated region
  $region6: #{down_forward.9} parent=0 // pred_check
    _
  $region7: #{down_forward.9} parent=0 // pred_check_branch
    %13 = sbr.rel (0) target = $region9
  $region8: #{down_forward.9} parent=0 // pred_region
    _
  $region9: #{down_forward.9} parent=0 // pred_fallthru
    _
  // Predicated region
  $region10: #{down_forward.9} parent=0 // pred_check
    _
  $region11: #{down_forward.9} parent=0 // pred_check_branch
    %15 = sbr.rel (0) target = $region13
  $region12: #{down_forward.9} parent=0 // pred_region
    _
  $region13: #{down_forward.9} parent=0 // pred_fallthru
    _
  // Predicated region
  $region14: #{down_forward.9} parent=0 // pred_check
    _
  $region15: #{down_forward.9} parent=0 // pred_check_branch
    %17 = sbr.rel (0) target = $region17
  $region16: #{down_forward.9} parent=0 // pred_region
    _
  $region17: #{down_forward.9} parent=0 // pred_fallthru
    _
  // Predicated region
  $region18: #{down_forward.9} parent=0 // pred_check
    _
  $region19: #{down_forward.9} parent=0 // pred_check_branch
    %19 = sbr.rel (0) target = $region21
  $region20: #{down_forward.9} parent=0 // pred_region
    _
  $region21: #{down_forward.9} parent=0 // pred_fallthru
    _
  %v20 = vld [vmem:[%s0] sm:$0xff]
  %v21 = vld [vmem:[%s0 + $0x8] sm:$0xff]
  %v22 = vld [vmem:[%s0 + $0x10] sm:$0xff]
  %v23 = vld [vmem:[%s0 + $0x18] sm:$0xff]
  %v24 = vld [vmem:[%s0 + $0x20] sm:$0xff]
  %v25 = vld [vmem:[%s0 + $0x28] sm:$0xff]
  %v26 = vld [vmem:[%s0 + $0x30] sm:$0xff]
  %v27 = vld [vmem:[%s0 + $0x38] sm:$0xff]
  %v28 = vld [vmem:[%s0 + $0x40] sm:$0xff]
  %v29 = vld [vmem:[%s0 + $0x48] sm:$0xff]
  %v30 = vld [vmem:[%s0 + $0x50] sm:$0xff]
  %v31 = vld [vmem:[%s0 + $0x58] sm:$0xff]
  %v32 = vld [vmem:[%s0 + $0x60] sm:$0xff]
  %v33 = vld [vmem:[%s0 + $0x68] sm:$0xff]
  %v34 = vld [vmem:[%s0 + $0x70] sm:$0xff]
  %v35 = vld [vmem:[%s0 + $0x78] sm:$0xff]
  %v36 = vld [vmem:[%s1] sm:$0x1]
  %v38 = vlaneseq
  %v39 = vshrl.u32 %v38, 7
  %v40 = vsub.s32 0, %v39
  %v41 = vrot.slane %v36, %v40
  %v43 = vmul.f32 %v20, %v41
  %v44 = vmul.f32 %v21, %v41
  %v45 = vmul.f32 %v22, %v41
  %v46 = vmul.f32 %v23, %v41
  %v47 = vmul.f32 %v24, %v41
  %v48 = vmul.f32 %v25, %v41
  %v49 = vmul.f32 %v26, %v41
  %v50 = vmul.f32 %v27, %v41
  %v51 = vmul.f32 %v28, %v41
  %v52 = vmul.f32 %v29, %v41
  %v53 = vmul.f32 %v30, %v41
  %v54 = vmul.f32 %v31, %v41
  %v55 = vmul.f32 %v32, %v41
  %v56 = vmul.f32 %v33, %v41
  %v57 = vmul.f32 %v34, %v41
  %v58 = vmul.f32 %v35, %v41
  %v59 = vld [vmem:[%s2] sm:$0x1]
  %v61 = vlaneseq
  %v62 = vshrl.u32 %v61, 7
  %v63 = vsub.s32 0, %v62
  %v64 = vrot.slane %v59, %v63
  %v66 = vadd.f32 %v43, %v64
  %v67 = vadd.f32 %v44, %v64
  %v68 = vadd.f32 %v45, %v64
  %v69 = vadd.f32 %v46, %v64
  %v70 = vadd.f32 %v47, %v64
  %v71 = vadd.f32 %v48, %v64
  %v72 = vadd.f32 %v49, %v64
  %v73 = vadd.f32 %v50, %v64
  %v74 = vadd.f32 %v51, %v64
  %v75 = vadd.f32 %v52, %v64
  %v76 = vadd.f32 %v53, %v64
  %v77 = vadd.f32 %v54, %v64
  %v78 = vadd.f32 %v55, %v64
  %v79 = vadd.f32 %v56, %v64
  %v80 = vadd.f32 %v57, %v64
  %v81 = vadd.f32 %v58, %v64
  %v82 = vmax.f32 %v66, 0.0
  %v83 = vmax.f32 %v67, 0.0
  %v84 = vmax.f32 %v68, 0.0
  %v85 = vmax.f32 %v69, 0.0
  %v86 = vmax.f32 %v70, 0.0
  %v87 = vmax.f32 %v71, 0.0
  %v88 = vmax.f32 %v72, 0.0
  %v89 = vmax.f32 %v73, 0.0
  %v90 = vmax.f32 %v74, 0.0
  %v91 = vmax.f32 %v75, 0.0
  %v92 = vmax.f32 %v76, 0.0
  %v93 = vmax.f32 %v77, 0.0
  %v94 = vmax.f32 %v78, 0.0
  %v95 = vmax.f32 %v79, 0.0
  %v96 = vmax.f32 %v80, 0.0
  %v97 = vmax.f32 %v81, 0.0
  %v98 = vld [vmem:[%s3] sm:$0x1]
  %v100 = vlaneseq
  %v101 = vshrl.u32 %v100, 7
  %v102 = vsub.s32 0, %v101
  %v103 = vrot.slane %v98, %v102
  %v105 = vmul.f32 %v82, %v103
  %v106 = vmul.f32 %v83, %v103
  %v107 = vmul.f32 %v84, %v103
  %v108 = vmul.f32 %v85, %v103
  %v109 = vmul.f32 %v86, %v103
  %v110 = vmul.f32 %v87, %v103
  %v111 = vmul.f32 %v88, %v103
  %v112 = vmul.f32 %v89, %v103
  %v113 = vmul.f32 %v90, %v103
  %v114 = vmul.f32 %v91, %v103
  %v115 = vmul.f32 %v92, %v103
  %v116 = vmul.f32 %v93, %v103
  %v117 = vmul.f32 %v94, %v103
  %v118 = vmul.f32 %v95, %v103
  %v119 = vmul.f32 %v96, %v103
  %v120 = vmul.f32 %v97, %v103
  %v121 = vld [vmem:[%s4] sm:$0x1]
  %v123 = vlaneseq
  %v124 = vshrl.u32 %v123, 7
  %v125 = vsub.s32 0, %v124
  %v126 = vrot.slane %v121, %v125
  %v128 = vadd.f32 %v105, %v126
  %v129 = vadd.f32 %v106, %v126
  %v130 = vadd.f32 %v107, %v126
  %v131 = vadd.f32 %v108, %v126
  %v132 = vadd.f32 %v109, %v126
  %v133 = vadd.f32 %v110, %v126
  %v134 = vadd.f32 %v111, %v126
  %v135 = vadd.f32 %v112, %v126
  %v136 = vadd.f32 %v113, %v126
  %v137 = vadd.f32 %v114, %v126
  %v138 = vadd.f32 %v115, %v126
  %v139 = vadd.f32 %v116, %v126
  %v140 = vadd.f32 %v117, %v126
  %v141 = vadd.f32 %v118, %v126
  %v142 = vadd.f32 %v119, %v126
  %v143 = vadd.f32 %v120, %v126
  %v144 = vmax.f32 %v128, 0.0
  %v145 = vmax.f32 %v129, 0.0
  %v146 = vmax.f32 %v130, 0.0
  %v147 = vmax.f32 %v131, 0.0
  %v148 = vmax.f32 %v132, 0.0
  %v149 = vmax.f32 %v133, 0.0
  %v150 = vmax.f32 %v134, 0.0
  %v151 = vmax.f32 %v135, 0.0
  %v152 = vmax.f32 %v136, 0.0
  %v153 = vmax.f32 %v137, 0.0
  %v154 = vmax.f32 %v138, 0.0
  %v155 = vmax.f32 %v139, 0.0
  %v156 = vmax.f32 %v140, 0.0
  %v157 = vmax.f32 %v141, 0.0
  %v158 = vmax.f32 %v142, 0.0
  %v159 = vmax.f32 %v143, 0.0
  %160 = vst [vmem:[%s5] sm:$0xff] %v144
  %161 = vst [vmem:[%s5 + $0x8] sm:$0xff] %v145
  %162 = vst [vmem:[%s5 + $0x10] sm:$0xff] %v146
  %163 = vst [vmem:[%s5 + $0x18] sm:$0xff] %v147
  %164 = vst [vmem:[%s5 + $0x20] sm:$0xff] %v148
  %165 = vst [vmem:[%s5 + $0x28] sm:$0xff] %v149
  %166 = vst [vmem:[%s5 + $0x30] sm:$0xff] %v150
  %167 = vst [vmem:[%s5 + $0x38] sm:$0xff] %v151
  %168 = vst [vmem:[%s5 + $0x40] sm:$0xff] %v152
  %169 = vst [vmem:[%s5 + $0x48] sm:$0xff] %v153
  %170 = vst [vmem:[%s5 + $0x50] sm:$0xff] %v154
  %171 = vst [vmem:[%s5 + $0x58] sm:$0xff] %v155
  %172 = vst [vmem:[%s5 + $0x60] sm:$0xff] %v156
  %173 = vst [vmem:[%s5 + $0x68] sm:$0xff] %v157
  %174 = vst [vmem:[%s5 + $0x70] sm:$0xff] %v158
  %175 = vst [vmem:[%s5 + $0x78] sm:$0xff] %v159
  // Predicated region
  $region22: #{down_forward.9} parent=0 // pred_check
    _
  $region23: #{down_forward.9} parent=0 // pred_check_branch
    %177 = sbr.rel (0) target = $region25
  $region24: #{down_forward.9} parent=0 // pred_region
    _
  $region25: #{down_forward.9} parent=0 // pred_fallthru
    _
  // Predicated region
  $region26: #{down_forward.9} parent=0 // pred_check
    _
  $region27: #{down_forward.9} parent=0 // pred_check_branch
    %179 = sbr.rel (0) target = $region29
  $region28: #{down_forward.9} parent=0 // pred_region
    _
  $region29: #{down_forward.9} parent=0 // pred_fallthru
    _

// kernel: down_forward.8
$region0: #{down_forward.8}
  #allocation0 [shape = 'u32[]', space=smem, size = 0x4, offset = 0x4, fixed_abs, tag = 'smem constant byte address 0x4 - core index']
  #allocation1 [shape = 'u32[144,128]{1,0:T(1,128)}', space=vmem, size = 0x12000, scoped, tag = 'internal scratch']
  %s0 = inlined_call_operand.hbm [shape: f32[128,128], index: 0, kind: input, shape index: {}]
  %s1 = inlined_call_operand.vmem [shape: f32[1,128], index: 1, kind: input, shape index: {}]
  %s2 = inlined_call_operand.vmem [shape: f32[1,128], index: 2, kind: input, shape index: {}]
  %s3 = inlined_call_operand.vmem [shape: f32[1,2,128], index: 3, kind: output, shape index: {}]
  %s4 = sld [smem:[#allocation0]]
  $region26: #{down_forward.8} parent=0
    _
  %s6 = ssub.s32 1, %s4
  %s7 = scalar_select 0, %s6, %s4
  $region1: #{down_forward.8} parent=0
    #allocation2 [shape = 'u8[65536]{0}', space=vmem, size = 0x10000, scoped, tag = 'input window, operand 0, single buffered']
    #allocation3 [shape = 's32[1]{0}', space=sflag, size = 0x4, scoped, tag = 'scoped memory for down_forward.8']
    %8 = vsyncpa [#allocation3], 0
    // Predicated region
    $region2: #{down_forward.8} parent=1 // pred_check
      _
    $region3: #{down_forward.8} parent=1 // pred_check_branch
      %10 = sbr.rel (0) target = $region5
    $region4: #{down_forward.8} parent=1 // pred_region
      %s12 = ssub.s32 2048, 2048
      %13 = vsyncadd [#allocation3], %s12
      %s14 = sshll.u32 [#allocation2], 4
      %s15 = int_to_ptr.vmem [resolvable:$true] %s14
      %20 = dma.hbm_to_vmem [thread:$0]  %s0, 2048, %s15, [#allocation3], 128, 128, 8
    $region5: #{down_forward.8} parent=1 // pred_fallthru
      _
    // Predicated region
    $region6: #{down_forward.8} parent=1 // pred_check
      _
    $region7: #{down_forward.8} parent=1 // pred_check_branch
      %22 = sbr.rel (0) target = $region9
    $region8: #{down_forward.8} parent=1 // pred_region
      _
    $region9: #{down_forward.8} parent=1 // pred_fallthru
      _
    // Predicated region
    $region10: #{down_forward.8} parent=1 // pred_check
      _
    $region11: #{down_forward.8} parent=1 // pred_check_branch
      %24 = sbr.rel (0) target = $region13
    $region12: #{down_forward.8} parent=1 // pred_region
      _
    $region13: #{down_forward.8} parent=1 // pred_fallthru
      _
    // Predicated region
    $region14: #{down_forward.8} parent=1 // pred_check
      _
    $region15: #{down_forward.8} parent=1 // pred_check_branch
      %26 = sbr.rel (0) target = $region17
    $region16: #{down_forward.8} parent=1 // pred_region
      %27 = dma.done [#allocation3], 2048
    $region17: #{down_forward.8} parent=1 // pred_fallthru
      _
    %v28 = vld [vmem:[#allocation2] sm:$0xff]
    %v29 = vld [vmem:[#allocation2 + $0x8] sm:$0xff]
    %v30 = vld [vmem:[#allocation2 + $0x10] sm:$0xff]
    %v31 = vld [vmem:[#allocation2 + $0x18] sm:$0xff]
    %v32 = vld [vmem:[#allocation2 + $0x20] sm:$0xff]
    %v33 = vld [vmem:[#allocation2 + $0x28] sm:$0xff]
    %v34 = vld [vmem:[#allocation2 + $0x30] sm:$0xff]
    %v35 = vld [vmem:[#allocation2 + $0x38] sm:$0xff]
    %v36 = vld [vmem:[#allocation2 + $0x40] sm:$0xff]
    %v37 = vld [vmem:[#allocation2 + $0x48] sm:$0xff]
    %v38 = vld [vmem:[#allocation2 + $0x50] sm:$0xff]
    %v39 = vld [vmem:[#allocation2 + $0x58] sm:$0xff]
    %v40 = vld [vmem:[#allocation2 + $0x60] sm:$0xff]
    %v41 = vld [vmem:[#allocation2 + $0x68] sm:$0xff]
    %v42 = vld [vmem:[#allocation2 + $0x70] sm:$0xff]
    %v43 = vld [vmem:[#allocation2 + $0x78] sm:$0xff]
    %v44 = vld [vmem:[%s1] sm:$0x1]
    %v46 = vlaneseq
    %v47 = vshrl.u32 %v46, 7
    %v48 = vsub.s32 0, %v47
    %v49 = vrot.slane %v44, %v48
    %v51 = vmul.f32 %v28, %v49
    %v52 = vmul.f32 %v29, %v49
    %v53 = vmul.f32 %v30, %v49
    %v54 = vmul.f32 %v31, %v49
    %v55 = vmul.f32 %v32, %v49
    %v56 = vmul.f32 %v33, %v49
    %v57 = vmul.f32 %v34, %v49
    %v58 = vmul.f32 %v35, %v49
    %v59 = vmul.f32 %v36, %v49
    %v60 = vmul.f32 %v37, %v49
    %v61 = vmul.f32 %v38, %v49
    %v62 = vmul.f32 %v39, %v49
    %v63 = vmul.f32 %v40, %v49
    %v64 = vmul.f32 %v41, %v49
    %v65 = vmul.f32 %v42, %v49
    %v66 = vmul.f32 %v43, %v49
    %v67 = vld [vmem:[%s2] sm:$0x1]
    %v69 = vlaneseq
    %v70 = vshrl.u32 %v69, 7
    %v71 = vsub.s32 0, %v70
    %v72 = vrot.slane %v67, %v71
    %v74 = vadd.f32 %v51, %v72
    %v75 = vadd.f32 %v52, %v72
    %v76 = vadd.f32 %v53, %v72
    %v77 = vadd.f32 %v54, %v72
    %v78 = vadd.f32 %v55, %v72
    %v79 = vadd.f32 %v56, %v72
    %v80 = vadd.f32 %v57, %v72
    %v81 = vadd.f32 %v58, %v72
    %v82 = vadd.f32 %v59, %v72
    %v83 = vadd.f32 %v60, %v72
    %v84 = vadd.f32 %v61, %v72
    %v85 = vadd.f32 %v62, %v72
    %v86 = vadd.f32 %v63, %v72
    %v87 = vadd.f32 %v64, %v72
    %v88 = vadd.f32 %v65, %v72
    %v89 = vadd.f32 %v66, %v72
    %v90 = vmax.f32 %v74, 0.0
    %v91 = vmax.f32 %v75, 0.0
    %v92 = vmax.f32 %v76, 0.0
    %v93 = vmax.f32 %v77, 0.0
    %v94 = vmax.f32 %v78, 0.0
    %v95 = vmax.f32 %v79, 0.0
    %v96 = vmax.f32 %v80, 0.0
    %v97 = vmax.f32 %v81, 0.0
    %v98 = vmax.f32 %v82, 0.0
    %v99 = vmax.f32 %v83, 0.0
    %v100 = vmax.f32 %v84, 0.0
    %v101 = vmax.f32 %v85, 0.0
    %v102 = vmax.f32 %v86, 0.0
    %v103 = vmax.f32 %v87, 0.0
    %v104 = vmax.f32 %v88, 0.0
    %v105 = vmax.f32 %v89, 0.0
    %v106 = vlaneseq
    %v107 = vshrl.u32 %v106, 7
    %v108 = vadd.s32 %v107, 8
    %v109 = vadd.s32 %v107, 16
    %v110 = vadd.s32 %v107, 24
    %v111 = vadd.s32 %v107, 32
    %v112 = vadd.s32 %v107, 40
    %v113 = vadd.s32 %v107, 48
    %v114 = vadd.s32 %v107, 56
    %v115 = vadd.s32 %v107, 64
    %v116 = vadd.s32 %v107, 72
    %v117 = vadd.s32 %v107, 80
    %v118 = vadd.s32 %v107, 88
    %v119 = vadd.s32 %v107, 96
    %v120 = vadd.s32 %v107, 104
    %v121 = vadd.s32 %v107, 112
    %v122 = vadd.s32 %v107, 120
    %s123 = smul.u32 0, 128
    %v124 = vstv %s123
    %v125 = vadd.s32 %v107, %v124
    %v126 = vadd.s32 %v108, %v124
    %v127 = vadd.s32 %v109, %v124
    %v128 = vadd.s32 %v110, %v124
    %v129 = vadd.s32 %v111, %v124
    %v130 = vadd.s32 %v112, %v124
    %v131 = vadd.s32 %v113, %v124
    %v132 = vadd.s32 %v114, %v124
    %v133 = vadd.s32 %v115, %v124
    %v134 = vadd.s32 %v116, %v124
    %v135 = vadd.s32 %v117, %v124
    %v136 = vadd.s32 %v118, %v124
    %v137 = vadd.s32 %v119, %v124
    %v138 = vadd.s32 %v120, %v124
    %v139 = vadd.s32 %v121, %v124
    %v140 = vadd.s32 %v122, %v124
    %vm141 = vcmp.lt.s32.totalorder %v125, 128
    %vm142 = vcmp.lt.s32.totalorder %v126, 128
    %vm143 = vcmp.lt.s32.totalorder %v127, 128
    %vm144 = vcmp.lt.s32.totalorder %v128, 128
    %vm145 = vcmp.lt.s32.totalorder %v129, 128
    %vm146 = vcmp.lt.s32.totalorder %v130, 128
    %vm147 = vcmp.lt.s32.totalorder %v131, 128
    %vm148 = vcmp.lt.s32.totalorder %v132, 128
    %vm149 = vcmp.lt.s32.totalorder %v133, 128
    %vm150 = vcmp.lt.s32.totalorder %v134, 128
    %vm151 = vcmp.lt.s32.totalorder %v135, 128
    %vm152 = vcmp.lt.s32.totalorder %v136, 128
    %vm153 = vcmp.lt.s32.totalorder %v137, 128
    %vm154 = vcmp.lt.s32.totalorder %v138, 128
    %vm155 = vcmp.lt.s32.totalorder %v139, 128
    %vm156 = vcmp.lt.s32.totalorder %v140, 128
    %v157 = vsel %vm141, 1, 0
    %v158 = vsel %vm142, 1, 0
    %v159 = vsel %vm143, 1, 0
    %v160 = vsel %vm144, 1, 0
    %v161 = vsel %vm145, 1, 0
    %v162 = vsel %vm146, 1, 0
    %v163 = vsel %vm147, 1, 0
    %v164 = vsel %vm148, 1, 0
    %v165 = vsel %vm149, 1, 0
    %v166 = vsel %vm150, 1, 0
    %v167 = vsel %vm151, 1, 0
    %v168 = vsel %vm152, 1, 0
    %v169 = vsel %vm153, 1, 0
    %v170 = vsel %vm154, 1, 0
    %v171 = vsel %vm155, 1, 0
    %v172 = vsel %vm156, 1, 0
    %vm173 = vcmp.eq.s32.totalorder %v157, 1
    %vm174 = vcmp.eq.s32.totalorder %v158, 1
    %vm175 = vcmp.eq.s32.totalorder %v159, 1
    %vm176 = vcmp.eq.s32.totalorder %v160, 1
    %vm177 = vcmp.eq.s32.totalorder %v161, 1
    %vm178 = vcmp.eq.s32.totalorder %v162, 1
    %vm179 = vcmp.eq.s32.totalorder %v163, 1
    %vm180 = vcmp.eq.s32.totalorder %v164, 1
    %vm181 = vcmp.eq.s32.totalorder %v165, 1
    %vm182 = vcmp.eq.s32.totalorder %v166, 1
    %vm183 = vcmp.eq.s32.totalorder %v167, 1
    %vm184 = vcmp.eq.s32.totalorder %v168, 1
    %vm185 = vcmp.eq.s32.totalorder %v169, 1
    %vm186 = vcmp.eq.s32.totalorder %v170, 1
    %vm187 = vcmp.eq.s32.totalorder %v171, 1
    %vm188 = vcmp.eq.s32.totalorder %v172, 1
    %v189 = vsel %vm173, %v90, 0.0
    %v190 = vsel %vm174, %v91, 0.0
    %v191 = vsel %vm175, %v92, 0.0
    %v192 = vsel %vm176, %v93, 0.0
    %v193 = vsel %vm177, %v94, 0.0
    %v194 = vsel %vm178, %v95, 0.0
    %v195 = vsel %vm179, %v96, 0.0
    %v196 = vsel %vm180, %v97, 0.0
    %v197 = vsel %vm181, %v98, 0.0
    %v198 = vsel %vm182, %v99, 0.0
    %v199 = vsel %vm183, %v100, 0.0
    %v200 = vsel %vm184, %v101, 0.0
    %v201 = vsel %vm185, %v102, 0.0
    %v202 = vsel %vm186, %v103, 0.0
    %v203 = vsel %vm187, %v104, 0.0
    %v204 = vsel %vm188, %v105, 0.0
    %v205 = vadd.f32 %v189, %v190
    %v206 = vadd.f32 %v205, %v191
    %v207 = vadd.f32 %v206, %v192
    %v208 = vadd.f32 %v207, %v193
    %v209 = vadd.f32 %v208, %v194
    %v210 = vadd.f32 %v209, %v195
    %v211 = vadd.f32 %v210, %v196
    %v212 = vadd.f32 %v211, %v197
    %v213 = vadd.f32 %v212, %v198
    %v214 = vadd.f32 %v213, %v199
    %v215 = vadd.f32 %v214, %v200
    %v216 = vadd.f32 %v215, %v201
    %v217 = vadd.f32 %v216, %v202
    %v218 = vadd.f32 %v217, %v203
    %v219 = vadd.f32 %v218, %v204
    %v220 = vrot.slane %v219, 4
    %v221 = vadd.f32 %v219, %v220
    %v222 = vrot.slane %v221, 2
    %v223 = vadd.f32 %v221, %v222
    %v224 = vrot.slane %v223, 1
    %v225 = vadd.f32 %v223, %v224
    %v226 = vmul.f32 %v189, %v189
    %v227 = vmul.f32 %v190, %v190
    %v228 = vmul.f32 %v191, %v191
    %v229 = vmul.f32 %v192, %v192
    %v230 = vmul.f32 %v193, %v193
    %v231 = vmul.f32 %v194, %v194
    %v232 = vmul.f32 %v195, %v195
    %v233 = vmul.f32 %v196, %v196
    %v234 = vmul.f32 %v197, %v197
    %v235 = vmul.f32 %v198, %v198
    %v236 = vmul.f32 %v199, %v199
    %v237 = vmul.f32 %v200, %v200
    %v238 = vmul.f32 %v201, %v201
    %v239 = vmul.f32 %v202, %v202
    %v240 = vmul.f32 %v203, %v203
    %v241 = vmul.f32 %v204, %v204
    %v242 = vadd.f32 %v226, %v227
    %v243 = vadd.f32 %v242, %v228
    %v244 = vadd.f32 %v243, %v229
    %v245 = vadd.f32 %v244, %v230
    %v246 = vadd.f32 %v245, %v231
    %v247 = vadd.f32 %v246, %v232
    %v248 = vadd.f32 %v247, %v233
    %v249 = vadd.f32 %v248, %v234
    %v250 = vadd.f32 %v249, %v235
    %v251 = vadd.f32 %v250, %v236
    %v252 = vadd.f32 %v251, %v237
    %v253 = vadd.f32 %v252, %v238
    %v254 = vadd.f32 %v253, %v239
    %v255 = vadd.f32 %v254, %v240
    %v256 = vadd.f32 %v255, %v241
    %v257 = vrot.slane %v256, 4
    %v258 = vadd.f32 %v256, %v257
    %v259 = vrot.slane %v258, 2
    %v260 = vadd.f32 %v258, %v259
    %v261 = vrot.slane %v260, 1
    %v262 = vadd.f32 %v260, %v261
    %vm263 = vcmask 1040384
    %v264 = vsel %vm263, %v225, %v262
    %265 = vst [vmem:[%s3] sm:$0x3] %v264
    // Predicated region
    $region18: #{down_forward.8} parent=1 // pred_check
      _
    $region19: #{down_forward.8} parent=1 // pred_check_branch
      %267 = sbr.rel (0) target = $region21
    $region20: #{down_forward.8} parent=1 // pred_region
      _
    $region21: #{down_forward.8} parent=1 // pred_fallthru
      _
    // Predicated region
    $region22: #{down_forward.8} parent=1 // pred_check
      _
    $region23: #{down_forward.8} parent=1 // pred_check_branch
      %269 = sbr.rel (0) target = $region25
    $region24: #{down_forward.8} parent=1 // pred_region
      _
    $region25: #{down_forward.8} parent=1 // pred_fallthru
      _
    %270 = vsyncpa [#allocation3], 1

</llo_original>
